<compile_context>
chip_gen: v7x
topology: tpu7x:2x2x1
jax: 0.10.0
libtpu: 0.0.40
codegen_flags: <defaults>
</compile_context>

<pallas_src>
import functools

import jax
import jax.numpy as jnp
from jax.experimental import pallas as pl
from jax.experimental.pallas import tpu as pltpu

BN_EPS = 1e-5
CLS_PAD = 128          # pad the class dim to one full 128-lane register


# ----------------------------------------------------------------------------
# in-kernel helpers (traced inside the single fused kernel body)
# ----------------------------------------------------------------------------
def _sel_matrix(rows_out, rows_in):
    """0/1 matrix S with S[r, 2r] = 1: stride-2 row subsample as a tiny MXU
    matmul (valid with batch folded into rows because each sequence occupies a
    contiguous, even-length row range)."""
    r = jax.lax.broadcasted_iota(jnp.int32, (rows_out, rows_in), 0)
    c = jax.lax.broadcasted_iota(jnp.int32, (rows_out, rows_in), 1)
    return (c == 2 * r).astype(jnp.float32)


def _avg_matrix(n, l):
    """(n, n*l) matrix averaging each length-l row block (== avg_pool1d over L)."""
    r = jax.lax.broadcasted_iota(jnp.int32, (n, n * l), 0)
    c = jax.lax.broadcasted_iota(jnp.int32, (n, n * l), 1)
    block = jnp.logical_and(c >= r * l, c < (r + 1) * l)
    return jnp.where(block, 1.0 / l, 0.0).astype(jnp.float32)


def _conv3_bn(x, n, l, w_ref, sb_ref, sel=None, residual=None):
    """Conv1d(k=3, stride 1 or 2, pad=1) + folded BN (+ residual) + ReLU.

    x: (n*l, Cin) f32, the n sequences stacked along rows.
    w_ref: (3*Cin, Cout) bf16 im2col weight; sb_ref: (2, Cout) f32 [scale;bias].
    If `sel` is given (stride 2) the im2col rows are subsampled before the
    matmul.  Returns (n*l_out, Cout) f32.
    """
    nl, cin = x.shape
    w = w_ref[...]
    sb = sb_ref[...]

    # shifted taps; zero the rows where the 3-tap window would cross a
    # sequence boundary (this *is* the Conv1d zero padding).
    z = jnp.zeros((1, cin), jnp.float32)
    row = jax.lax.broadcasted_iota(jnp.int32, (nl, 1), 0)
    first = functools.reduce(jnp.logical_or, [row == b * l for b in range(n)])
    last = functools.reduce(jnp.logical_or,
                            [row == b * l + (l - 1) for b in range(n)])
    left = jnp.where(first, 0.0, jnp.concatenate([z, x[:nl - 1, :]], axis=0))
    right = jnp.where(last, 0.0, jnp.concatenate([x[1:, :], z], axis=0))

    a = jnp.concatenate([left, x, right], axis=-1)            # (n*l, 3*Cin)
    if sel is not None:                                       # stride-2 subsample
        a = jnp.dot(sel, a, preferred_element_type=jnp.float32)

    y = jnp.dot(a.astype(jnp.bfloat16), w,                    # bf16 MXU, f32 acc
                preferred_element_type=jnp.float32)
    y = y * sb[0:1, :] + sb[1:2, :]                           # folded BatchNorm
    if residual is not None:
        y = y + residual
    return jnp.maximum(y, 0.0)                                # ReLU


def _proj_shortcut(x, w_ref, sb_ref, sel):
    """1x1 conv (stride 2 via `sel`) + folded BN projection shortcut (f32 out)."""
    if sel is not None:
        x = jnp.dot(sel, x, preferred_element_type=jnp.float32)
    y = jnp.dot(x.astype(jnp.bfloat16), w_ref[...],
                preferred_element_type=jnp.float32)
    sb = sb_ref[...]
    return y * sb[0:1, :] + sb[1:2, :]


def _make_resnet_kernel(blocks, batch, seq_len):
    """Whole-network fused kernel.  `blocks`: tuple of (stride, has_projection)."""
    n = batch

    def kernel(*refs):
        cam_ref, emb_ref, logit_ref = refs[-3:]
        it = iter(refs[:-3])

        x = next(it)[...]                                     # (N*L, 2) f32
        h = _conv3_bn(x, n, seq_len, next(it), next(it))      # stem conv+BN+ReLU
        l = seq_len

        for stride, has_proj in blocks:                       # BasicBlocks
            w1, sb1, w2, sb2 = next(it), next(it), next(it), next(it)
            wsc, sbsc = (next(it), next(it)) if has_proj else (None, None)
            l_out = l // stride
            sel = _sel_matrix(n * l_out, n * l) if stride == 2 else None
            hc = _conv3_bn(h, n, l, w1, sb1, sel=sel)         # conv1+BN+ReLU
            res = _proj_shortcut(h, wsc, sbsc, sel) if has_proj else h
            h = _conv3_bn(hc, n, l_out, w2, sb2, residual=res)  # conv2+BN+add+ReLU
            l = l_out

        # fused head: CAM, embedding (avg_pool1d), logits.
        w_lin, b_lin = next(it), next(it)                     # (64,128) bf16, (1,128) f32
        cam = jnp.dot(h.astype(jnp.bfloat16), w_lin[...],
                      preferred_element_type=jnp.float32) + b_lin[...]
        avg = _avg_matrix(n, l)
        cam_ref[...] = cam                                    # (N*Lf, CLS_PAD)
        emb_ref[...] = jnp.dot(avg, h, preferred_element_type=jnp.float32)
        # Linear is affine => logits == mean over L of the CAM map.
        logit_ref[...] = jnp.dot(avg, cam, preferred_element_type=jnp.float32)

    return kernel


# ----------------------------------------------------------------------------
# wrapper
# ----------------------------------------------------------------------------
def resnet_forward(flat_params, x_ncl, *, blocks, num_classes):
    """Returns (cam, embedding, logits) matching the PyTorch ResNet forward."""
    batch, _, seq = x_ncl.shape
    # NCL -> (N*L, C): tiny (<1 KiB) layout op left to XLA; all compute runs in
    # the single fused Pallas kernel below.
    xf = jnp.transpose(x_ncl, (0, 2, 1)).astype(jnp.float32).reshape(batch * seq, -1)

    lf = seq // (2 ** sum(1 for s, _ in blocks if s == 2))
    feat = flat_params[-2].shape[0]
    cls_pad = flat_params[-1].shape[-1]
    n_in = 1 + len(flat_params)

    cam_flat, emb, logit_pad = pl.pallas_call(
        _make_resnet_kernel(blocks, batch, seq),
        out_shape=(
            jax.ShapeDtypeStruct((batch * lf, cls_pad), jnp.float32),
            jax.ShapeDtypeStruct((batch, feat), jnp.float32),
            jax.ShapeDtypeStruct((batch, cls_pad), jnp.float32),
        ),
        in_specs=[pl.BlockSpec(memory_space=pltpu.MemorySpace.VMEM)] * n_in,
        out_specs=(pl.BlockSpec(memory_space=pltpu.MemorySpace.VMEM),) * 3,
        compiler_params=pltpu.CompilerParams(vmem_limit_bytes=32 * 1024 * 1024),
    )(xf, *flat_params)

    cam = jnp.transpose(cam_flat.reshape(batch, lf, cls_pad)[:, :, :num_classes],
                        (0, 2, 1))                            # (N, num_classes, Lf)
    return cam, emb, logit_pad[:, :num_classes]


# ----------------------------------------------------------------------------
# parameters (deterministic, mirroring the PyTorch __init__)
# ----------------------------------------------------------------------------
def _kaiming(key, shape, fan_in):
    # torch.nn.init.kaiming_normal_ default: std = sqrt(2 / fan_in)
    return jax.random.normal(key, shape, jnp.float32) * jnp.sqrt(2.0 / fan_in)


def _bn_fold(c):
    # TODO(synk): BatchNorm is folded with inference-mode statistics
    # (gamma=1, beta=0, running stats 0/1); training-mode batch statistics are
    # not implemented.
    scale = jnp.full((c,), 1.0 / jnp.sqrt(1.0 + BN_EPS), jnp.float32)
    bias = jnp.zeros((c,), jnp.float32)
    return jnp.stack([scale, bias], axis=0)                   # (2, C)


def init_params(key, num_blocks=(1, 1, 1), num_classes=10):
    """Flat kernel-operand list + static block config.

    Conv k=3 weights stored as (3*Cin, Cout) bf16 (im2col layout), 1x1 shortcut
    as (Cin, Cout) bf16, BN as (2, C) f32 [scale; bias], linear as W^T padded to
    (64, CLS_PAD) bf16 plus (1, CLS_PAD) f32 bias.
    """
    keys = iter(jax.random.split(key, 64))
    flat, blocks = [], []

    def conv3_w(cin, cout):
        w = _kaiming(next(keys), (3, cin, cout), fan_in=cin * 3)
        return w.reshape(3 * cin, cout).astype(jnp.bfloat16)

    flat += [conv3_w(2, 16), _bn_fold(16)]                    # stem

    in_planes = 16
    for planes, nb, stride in zip((16, 32, 64), num_blocks, (1, 2, 2)):
        for s in [stride] + [1] * (nb - 1):
            # TODO(synk): `block` class not given in the spec; the standard
            # BasicBlock (expansion=1, 1x1-conv+BN projection shortcut) is assumed.
            has_proj = (s != 1) or (in_planes != planes)
            flat += [conv3_w(in_planes, planes), _bn_fold(planes),
                     conv3_w(planes, planes), _bn_fold(planes)]
            if has_proj:
                wsc = _kaiming(next(keys), (in_planes, planes), fan_in=in_planes)
                flat += [wsc.astype(jnp.bfloat16), _bn_fold(planes)]
            blocks.append((s, has_proj))
            in_planes = planes

    wt = _kaiming(next(keys), (in_planes, num_classes), fan_in=in_planes)
    bound = 1.0 / jnp.sqrt(float(in_planes))
    b = jax.random.uniform(next(keys), (num_classes,), jnp.float32,
                           minval=-bound, maxval=bound)
    flat += [jnp.zeros((in_planes, CLS_PAD), jnp.bfloat16)
             .at[:, :num_classes].set(wt.astype(jnp.bfloat16)),
             jnp.zeros((1, CLS_PAD), jnp.float32).at[0, :num_classes].set(b)]
    return flat, tuple(blocks), num_classes


# ----------------------------------------------------------------------------
# pure-JAX reference (XLA, f32) for a numerical sanity check
# ----------------------------------------------------------------------------
def _ref_forward(flat_params, x_ncl, blocks, num_classes):
    it = iter(flat_params)

    def conv3(x, w, sb, stride=1):
        nb, ll, cin = x.shape
        wf = w.astype(jnp.float32).reshape(3, cin, -1)
        xp = jnp.pad(x, ((0, 0), (1, 1), (0, 0)))
        y = sum(jnp.einsum("nlc,co->nlo", xp[:, k:k + ll, :], wf[k])
                for k in range(3))
        return y[:, ::stride, :] * sb[0] + sb[1]

    h = jax.nn.relu(conv3(jnp.transpose(x_ncl, (0, 2, 1)).astype(jnp.float32),
                          next(it), next(it)))
    for stride, has_proj in blocks:
        w1, sb1, w2, sb2 = next(it), next(it), next(it), next(it)
        if has_proj:
            wsc, sbsc = next(it), next(it)
            sc = (jnp.einsum("nlc,co->nlo", h[:, ::stride, :],
                             wsc.astype(jnp.float32)) * sbsc[0] + sbsc[1])
        else:
            sc = h
        h = jax.nn.relu(conv3(jax.nn.relu(conv3(h, w1, sb1, stride)),
                              w2, sb2) + sc)
    w_lin, b_lin = next(it), next(it)
    wt = w_lin.astype(jnp.float32)[:, :num_classes]
    b = b_lin[0, :num_classes]
    emb = jnp.mean(h, axis=1)
    logits = emb @ wt + b
    cam = jnp.einsum("nlc,ck->nkl", h, wt) + b[None, :, None]
    return cam, emb, logits


if __name__ == "__main__":
    key = jax.random.PRNGKey(0)
    pkey, xkey = jax.random.split(key)
    flat, blocks, ncls = init_params(pkey, num_blocks=(1, 1, 1), num_classes=10)

    # PyTorch input layout: (N, C=2, L) = (2, 2, 32)
    x = jax.random.normal(xkey, (2, 2, 32), jnp.float32)

    fwd = jax.jit(functools.partial(resnet_forward, blocks=blocks,
                                    num_classes=ncls))
    cam, emb, logits = fwd(flat, x)
    jax.block_until_ready((cam, emb, logits))

    assert cam.shape == (2, ncls, 8)
    assert emb.shape == (2, 64)
    assert logits.shape == (2, ncls)

    # loose tolerance: kernel uses bf16 MXU inputs with f32 accumulation
    cam_r, emb_r, log_r = _ref_forward(flat, x, blocks, ncls)
    for got, ref in ((cam, cam_r), (emb, emb_r), (logits, log_r)):
        assert jnp.allclose(got, ref, rtol=0.1, atol=0.1), (
            float(jnp.max(jnp.abs(got - ref))))

    print("KERNEL_OK")
</pallas_src>

<mosaic_0001>
module attributes {stable_mosaic.version = 11 : i64} {
  func.func @kernel(%arg0: memref<64x2xf32, #tpu.memory_space<vmem>>, %arg1: memref<6x16xbf16, #tpu.memory_space<vmem>>, %arg2: memref<2x16xf32, #tpu.memory_space<vmem>>, %arg3: memref<48x16xbf16, #tpu.memory_space<vmem>>, %arg4: memref<2x16xf32, #tpu.memory_space<vmem>>, %arg5: memref<48x16xbf16, #tpu.memory_space<vmem>>, %arg6: memref<2x16xf32, #tpu.memory_space<vmem>>, %arg7: memref<48x32xbf16, #tpu.memory_space<vmem>>, %arg8: memref<2x32xf32, #tpu.memory_space<vmem>>, %arg9: memref<96x32xbf16, #tpu.memory_space<vmem>>, %arg10: memref<2x32xf32, #tpu.memory_space<vmem>>, %arg11: memref<16x32xbf16, #tpu.memory_space<vmem>>, %arg12: memref<2x32xf32, #tpu.memory_space<vmem>>, %arg13: memref<96x64xbf16, #tpu.memory_space<vmem>>, %arg14: memref<2x64xf32, #tpu.memory_space<vmem>>, %arg15: memref<192x64xbf16, #tpu.memory_space<vmem>>, %arg16: memref<2x64xf32, #tpu.memory_space<vmem>>, %arg17: memref<32x64xbf16, #tpu.memory_space<vmem>>, %arg18: memref<2x64xf32, #tpu.memory_space<vmem>>, %arg19: memref<64x128xbf16, #tpu.memory_space<vmem>>, %arg20: memref<1x128xf32, #tpu.memory_space<vmem>>, %arg21: memref<16x128xf32, #tpu.memory_space<vmem>>, %arg22: memref<2x64xf32, #tpu.memory_space<vmem>>, %arg23: memref<2x128xf32, #tpu.memory_space<vmem>>) attributes {dimension_semantics = [], scalar_prefetch = 0 : i64, scratch_operands = 0 : i64, tpu.core_type = #tpu.core_type<tc>} {
    %c0 = arith.constant 0 : index
    %c0_0 = arith.constant 0 : index
    %0 = vector.load %arg0[%c0, %c0_0] : memref<64x2xf32, #tpu.memory_space<vmem>>, vector<64x2xf32>
    %c0_1 = arith.constant 0 : index
    %c0_2 = arith.constant 0 : index
    %1 = vector.load %arg1[%c0_1, %c0_2] : memref<6x16xbf16, #tpu.memory_space<vmem>>, vector<6x16xbf16>
    %c0_3 = arith.constant 0 : index
    %c0_4 = arith.constant 0 : index
    %2 = vector.load %arg2[%c0_3, %c0_4] : memref<2x16xf32, #tpu.memory_space<vmem>>, vector<2x16xf32>
    %cst = arith.constant 0.000000e+00 : f32
    %3 = vector.broadcast %cst : f32 to vector<1x2xf32>
    %4 = tpu.iota {dimensions = array<i32: 0>} : vector<64x1xi32>
    %c0_i32 = arith.constant 0 : i32
    %5 = vector.broadcast %c0_i32 : i32 to vector<64x1xi32>
    %6 = arith.cmpi eq, %4, %5 : vector<64x1xi32>
    %c32_i32 = arith.constant 32 : i32
    %7 = vector.broadcast %c32_i32 : i32 to vector<64x1xi32>
    %8 = arith.cmpi eq, %4, %7 : vector<64x1xi32>
    %9 = arith.ori %6, %8 : vector<64x1xi1>
    %c31_i32 = arith.constant 31 : i32
    %10 = vector.broadcast %c31_i32 : i32 to vector<64x1xi32>
    %11 = arith.cmpi eq, %4, %10 : vector<64x1xi32>
    %c63_i32 = arith.constant 63 : i32
    %12 = vector.broadcast %c63_i32 : i32 to vector<64x1xi32>
    %13 = arith.cmpi eq, %4, %12 : vector<64x1xi32>
    %14 = arith.ori %11, %13 : vector<64x1xi1>
    %15 = vector.extract_strided_slice %0 {offsets = [0, 0], sizes = [63, 2], strides = [1, 1]} : vector<64x2xf32> to vector<63x2xf32>
    %16 = tpu.concatenate %3, %15 in 0 : vector<1x2xf32>, vector<63x2xf32> -> vector<64x2xf32>
    %cst_5 = arith.constant 0.000000e+00 : f32
    %17 = vector.shape_cast %9 : vector<64x1xi1> to vector<64x1xi1>
    %18 = vector.broadcast %17 : vector<64x1xi1> to vector<64x2xi1>
    %19 = vector.broadcast %cst_5 : f32 to vector<64x2xf32>
    %20 = arith.select %18, %19, %16 : vector<64x2xi1>, vector<64x2xf32>
    %21 = vector.extract_strided_slice %0 {offsets = [1, 0], sizes = [63, 2], strides = [1, 1]} : vector<64x2xf32> to vector<63x2xf32>
    %22 = tpu.concatenate %21, %3 in 0 : vector<63x2xf32>, vector<1x2xf32> -> vector<64x2xf32>
    %cst_6 = arith.constant 0.000000e+00 : f32
    %23 = vector.shape_cast %14 : vector<64x1xi1> to vector<64x1xi1>
    %24 = vector.broadcast %23 : vector<64x1xi1> to vector<64x2xi1>
    %25 = vector.broadcast %cst_6 : f32 to vector<64x2xf32>
    %26 = arith.select %24, %25, %22 : vector<64x2xi1>, vector<64x2xf32>
    %27 = tpu.concatenate %20, %0, %26 in 1 : vector<64x2xf32>, vector<64x2xf32>, vector<64x2xf32> -> vector<64x6xf32>
    %28 = arith.truncf %27 : vector<64x6xf32> to vector<64x6xbf16>
    %cst_7 = arith.constant dense<0.000000e+00> : vector<64x16xf32>
    %29 = tpu.matmul %28, %1, %cst_7 {dimension_numbers = #tpu.dot_dimension_numbers<[1], [0], [0], [1], [0, 0, 1, 1], [], []>} : vector<64x6xbf16>, vector<6x16xbf16>, vector<64x16xf32> -> vector<64x16xf32>
    %30 = vector.extract_strided_slice %2 {offsets = [0, 0], sizes = [1, 16], strides = [1, 1]} : vector<2x16xf32> to vector<1x16xf32>
    %31 = vector.broadcast %30 : vector<1x16xf32> to vector<64x16xf32>
    %32 = arith.mulf %29, %31 : vector<64x16xf32>
    %33 = vector.extract_strided_slice %2 {offsets = [1, 0], sizes = [1, 16], strides = [1, 1]} : vector<2x16xf32> to vector<1x16xf32>
    %34 = vector.broadcast %33 : vector<1x16xf32> to vector<64x16xf32>
    %35 = arith.addf %32, %34 : vector<64x16xf32>
    %cst_8 = arith.constant 0.000000e+00 : f32
    %36 = vector.broadcast %cst_8 : f32 to vector<64x16xf32>
    %37 = arith.maximumf %35, %36 : vector<64x16xf32>
    %c0_9 = arith.constant 0 : index
    %c0_10 = arith.constant 0 : index
    %38 = vector.load %arg3[%c0_9, %c0_10] : memref<48x16xbf16, #tpu.memory_space<vmem>>, vector<48x16xbf16>
    %c0_11 = arith.constant 0 : index
    %c0_12 = arith.constant 0 : index
    %39 = vector.load %arg4[%c0_11, %c0_12] : memref<2x16xf32, #tpu.memory_space<vmem>>, vector<2x16xf32>
    %cst_13 = arith.constant 0.000000e+00 : f32
    %40 = vector.broadcast %cst_13 : f32 to vector<1x16xf32>
    %41 = tpu.iota {dimensions = array<i32: 0>} : vector<64x1xi32>
    %c0_i32_14 = arith.constant 0 : i32
    %42 = vector.broadcast %c0_i32_14 : i32 to vector<64x1xi32>
    %43 = arith.cmpi eq, %41, %42 : vector<64x1xi32>
    %c32_i32_15 = arith.constant 32 : i32
    %44 = vector.broadcast %c32_i32_15 : i32 to vector<64x1xi32>
    %45 = arith.cmpi eq, %41, %44 : vector<64x1xi32>
    %46 = arith.ori %43, %45 : vector<64x1xi1>
    %c31_i32_16 = arith.constant 31 : i32
    %47 = vector.broadcast %c31_i32_16 : i32 to vector<64x1xi32>
    %48 = arith.cmpi eq, %41, %47 : vector<64x1xi32>
    %c63_i32_17 = arith.constant 63 : i32
    %49 = vector.broadcast %c63_i32_17 : i32 to vector<64x1xi32>
    %50 = arith.cmpi eq, %41, %49 : vector<64x1xi32>
    %51 = arith.ori %48, %50 : vector<64x1xi1>
    %52 = vector.extract_strided_slice %37 {offsets = [0, 0], sizes = [63, 16], strides = [1, 1]} : vector<64x16xf32> to vector<63x16xf32>
    %53 = tpu.concatenate %40, %52 in 0 : vector<1x16xf32>, vector<63x16xf32> -> vector<64x16xf32>
    %cst_18 = arith.constant 0.000000e+00 : f32
    %54 = vector.shape_cast %46 : vector<64x1xi1> to vector<64x1xi1>
    %55 = vector.broadcast %54 : vector<64x1xi1> to vector<64x16xi1>
    %56 = vector.broadcast %cst_18 : f32 to vector<64x16xf32>
    %57 = arith.select %55, %56, %53 : vector<64x16xi1>, vector<64x16xf32>
    %58 = vector.extract_strided_slice %37 {offsets = [1, 0], sizes = [63, 16], strides = [1, 1]} : vector<64x16xf32> to vector<63x16xf32>
    %59 = tpu.concatenate %58, %40 in 0 : vector<63x16xf32>, vector<1x16xf32> -> vector<64x16xf32>
    %cst_19 = arith.constant 0.000000e+00 : f32
    %60 = vector.shape_cast %51 : vector<64x1xi1> to vector<64x1xi1>
    %61 = vector.broadcast %60 : vector<64x1xi1> to vector<64x16xi1>
    %62 = vector.broadcast %cst_19 : f32 to vector<64x16xf32>
    %63 = arith.select %61, %62, %59 : vector<64x16xi1>, vector<64x16xf32>
    %64 = tpu.concatenate %57, %37, %63 in 1 : vector<64x16xf32>, vector<64x16xf32>, vector<64x16xf32> -> vector<64x48xf32>
    %65 = arith.truncf %64 : vector<64x48xf32> to vector<64x48xbf16>
    %cst_20 = arith.constant dense<0.000000e+00> : vector<64x16xf32>
    %66 = tpu.matmul %65, %38, %cst_20 {dimension_numbers = #tpu.dot_dimension_numbers<[1], [0], [0], [1], [0, 0, 1, 1], [], []>} : vector<64x48xbf16>, vector<48x16xbf16>, vector<64x16xf32> -> vector<64x16xf32>
    %67 = vector.extract_strided_slice %39 {offsets = [0, 0], sizes = [1, 16], strides = [1, 1]} : vector<2x16xf32> to vector<1x16xf32>
    %68 = vector.broadcast %67 : vector<1x16xf32> to vector<64x16xf32>
    %69 = arith.mulf %66, %68 : vector<64x16xf32>
    %70 = vector.extract_strided_slice %39 {offsets = [1, 0], sizes = [1, 16], strides = [1, 1]} : vector<2x16xf32> to vector<1x16xf32>
    %71 = vector.broadcast %70 : vector<1x16xf32> to vector<64x16xf32>
    %72 = arith.addf %69, %71 : vector<64x16xf32>
    %cst_21 = arith.constant 0.000000e+00 : f32
    %73 = vector.broadcast %cst_21 : f32 to vector<64x16xf32>
    %74 = arith.maximumf %72, %73 : vector<64x16xf32>
    %c0_22 = arith.constant 0 : index
    %c0_23 = arith.constant 0 : index
    %75 = vector.load %arg5[%c0_22, %c0_23] : memref<48x16xbf16, #tpu.memory_space<vmem>>, vector<48x16xbf16>
    %c0_24 = arith.constant 0 : index
    %c0_25 = arith.constant 0 : index
    %76 = vector.load %arg6[%c0_24, %c0_25] : memref<2x16xf32, #tpu.memory_space<vmem>>, vector<2x16xf32>
    %cst_26 = arith.constant 0.000000e+00 : f32
    %77 = vector.broadcast %cst_26 : f32 to vector<1x16xf32>
    %78 = tpu.iota {dimensions = array<i32: 0>} : vector<64x1xi32>
    %c0_i32_27 = arith.constant 0 : i32
    %79 = vector.broadcast %c0_i32_27 : i32 to vector<64x1xi32>
    %80 = arith.cmpi eq, %78, %79 : vector<64x1xi32>
    %c32_i32_28 = arith.constant 32 : i32
    %81 = vector.broadcast %c32_i32_28 : i32 to vector<64x1xi32>
    %82 = arith.cmpi eq, %78, %81 : vector<64x1xi32>
    %83 = arith.ori %80, %82 : vector<64x1xi1>
    %c31_i32_29 = arith.constant 31 : i32
    %84 = vector.broadcast %c31_i32_29 : i32 to vector<64x1xi32>
    %85 = arith.cmpi eq, %78, %84 : vector<64x1xi32>
    %c63_i32_30 = arith.constant 63 : i32
    %86 = vector.broadcast %c63_i32_30 : i32 to vector<64x1xi32>
    %87 = arith.cmpi eq, %78, %86 : vector<64x1xi32>
    %88 = arith.ori %85, %87 : vector<64x1xi1>
    %89 = vector.extract_strided_slice %74 {offsets = [0, 0], sizes = [63, 16], strides = [1, 1]} : vector<64x16xf32> to vector<63x16xf32>
    %90 = tpu.concatenate %77, %89 in 0 : vector<1x16xf32>, vector<63x16xf32> -> vector<64x16xf32>
    %cst_31 = arith.constant 0.000000e+00 : f32
    %91 = vector.shape_cast %83 : vector<64x1xi1> to vector<64x1xi1>
    %92 = vector.broadcast %91 : vector<64x1xi1> to vector<64x16xi1>
    %93 = vector.broadcast %cst_31 : f32 to vector<64x16xf32>
    %94 = arith.select %92, %93, %90 : vector<64x16xi1>, vector<64x16xf32>
    %95 = vector.extract_strided_slice %74 {offsets = [1, 0], sizes = [63, 16], strides = [1, 1]} : vector<64x16xf32> to vector<63x16xf32>
    %96 = tpu.concatenate %95, %77 in 0 : vector<63x16xf32>, vector<1x16xf32> -> vector<64x16xf32>
    %cst_32 = arith.constant 0.000000e+00 : f32
    %97 = vector.shape_cast %88 : vector<64x1xi1> to vector<64x1xi1>
    %98 = vector.broadcast %97 : vector<64x1xi1> to vector<64x16xi1>
    %99 = vector.broadcast %cst_32 : f32 to vector<64x16xf32>
    %100 = arith.select %98, %99, %96 : vector<64x16xi1>, vector<64x16xf32>
    %101 = tpu.concatenate %94, %74, %100 in 1 : vector<64x16xf32>, vector<64x16xf32>, vector<64x16xf32> -> vector<64x48xf32>
    %102 = arith.truncf %101 : vector<64x48xf32> to vector<64x48xbf16>
    %cst_33 = arith.constant dense<0.000000e+00> : vector<64x16xf32>
    %103 = tpu.matmul %102, %75, %cst_33 {dimension_numbers = #tpu.dot_dimension_numbers<[1], [0], [0], [1], [0, 0, 1, 1], [], []>} : vector<64x48xbf16>, vector<48x16xbf16>, vector<64x16xf32> -> vector<64x16xf32>
    %104 = vector.extract_strided_slice %76 {offsets = [0, 0], sizes = [1, 16], strides = [1, 1]} : vector<2x16xf32> to vector<1x16xf32>
    %105 = vector.broadcast %104 : vector<1x16xf32> to vector<64x16xf32>
    %106 = arith.mulf %103, %105 : vector<64x16xf32>
    %107 = vector.extract_strided_slice %76 {offsets = [1, 0], sizes = [1, 16], strides = [1, 1]} : vector<2x16xf32> to vector<1x16xf32>
    %108 = vector.broadcast %107 : vector<1x16xf32> to vector<64x16xf32>
    %109 = arith.addf %106, %108 : vector<64x16xf32>
    %110 = arith.addf %109, %37 : vector<64x16xf32>
    %cst_34 = arith.constant 0.000000e+00 : f32
    %111 = vector.broadcast %cst_34 : f32 to vector<64x16xf32>
    %112 = arith.maximumf %110, %111 : vector<64x16xf32>
    %113 = tpu.iota {dimensions = array<i32: 0>} : vector<32x64xi32>
    %114 = tpu.iota {dimensions = array<i32: 1>} : vector<32x64xi32>
    %c2_i32 = arith.constant 2 : i32
    %115 = vector.broadcast %c2_i32 : i32 to vector<32x64xi32>
    %116 = arith.muli %115, %113 : vector<32x64xi32>
    %117 = arith.cmpi eq, %114, %116 : vector<32x64xi32>
    %118 = arith.extui %117 : vector<32x64xi1> to vector<32x64xi32>
    %119 = arith.sitofp %118 : vector<32x64xi32> to vector<32x64xf32>
    %c0_35 = arith.constant 0 : index
    %c0_36 = arith.constant 0 : index
    %120 = vector.load %arg7[%c0_35, %c0_36] : memref<48x32xbf16, #tpu.memory_space<vmem>>, vector<48x32xbf16>
    %c0_37 = arith.constant 0 : index
    %c0_38 = arith.constant 0 : index
    %121 = vector.load %arg8[%c0_37, %c0_38] : memref<2x32xf32, #tpu.memory_space<vmem>>, vector<2x32xf32>
    %cst_39 = arith.constant 0.000000e+00 : f32
    %122 = vector.broadcast %cst_39 : f32 to vector<1x16xf32>
    %123 = tpu.iota {dimensions = array<i32: 0>} : vector<64x1xi32>
    %c0_i32_40 = arith.constant 0 : i32
    %124 = vector.broadcast %c0_i32_40 : i32 to vector<64x1xi32>
    %125 = arith.cmpi eq, %123, %124 : vector<64x1xi32>
    %c32_i32_41 = arith.constant 32 : i32
    %126 = vector.broadcast %c32_i32_41 : i32 to vector<64x1xi32>
    %127 = arith.cmpi eq, %123, %126 : vector<64x1xi32>
    %128 = arith.ori %125, %127 : vector<64x1xi1>
    %c31_i32_42 = arith.constant 31 : i32
    %129 = vector.broadcast %c31_i32_42 : i32 to vector<64x1xi32>
    %130 = arith.cmpi eq, %123, %129 : vector<64x1xi32>
    %c63_i32_43 = arith.constant 63 : i32
    %131 = vector.broadcast %c63_i32_43 : i32 to vector<64x1xi32>
    %132 = arith.cmpi eq, %123, %131 : vector<64x1xi32>
    %133 = arith.ori %130, %132 : vector<64x1xi1>
    %134 = vector.extract_strided_slice %112 {offsets = [0, 0], sizes = [63, 16], strides = [1, 1]} : vector<64x16xf32> to vector<63x16xf32>
    %135 = tpu.concatenate %122, %134 in 0 : vector<1x16xf32>, vector<63x16xf32> -> vector<64x16xf32>
    %cst_44 = arith.constant 0.000000e+00 : f32
    %136 = vector.shape_cast %128 : vector<64x1xi1> to vector<64x1xi1>
    %137 = vector.broadcast %136 : vector<64x1xi1> to vector<64x16xi1>
    %138 = vector.broadcast %cst_44 : f32 to vector<64x16xf32>
    %139 = arith.select %137, %138, %135 : vector<64x16xi1>, vector<64x16xf32>
    %140 = vector.extract_strided_slice %112 {offsets = [1, 0], sizes = [63, 16], strides = [1, 1]} : vector<64x16xf32> to vector<63x16xf32>
    %141 = tpu.concatenate %140, %122 in 0 : vector<63x16xf32>, vector<1x16xf32> -> vector<64x16xf32>
    %cst_45 = arith.constant 0.000000e+00 : f32
    %142 = vector.shape_cast %133 : vector<64x1xi1> to vector<64x1xi1>
    %143 = vector.broadcast %142 : vector<64x1xi1> to vector<64x16xi1>
    %144 = vector.broadcast %cst_45 : f32 to vector<64x16xf32>
    %145 = arith.select %143, %144, %141 : vector<64x16xi1>, vector<64x16xf32>
    %146 = tpu.concatenate %139, %112, %145 in 1 : vector<64x16xf32>, vector<64x16xf32>, vector<64x16xf32> -> vector<64x48xf32>
    %cst_46 = arith.constant dense<0.000000e+00> : vector<32x48xf32>
    %147 = tpu.matmul %119, %146, %cst_46 {dimension_numbers = #tpu.dot_dimension_numbers<[1], [0], [0], [1], [0, 0, 1, 1], [], []>} : vector<32x64xf32>, vector<64x48xf32>, vector<32x48xf32> -> vector<32x48xf32>
    %148 = arith.truncf %147 : vector<32x48xf32> to vector<32x48xbf16>
    %cst_47 = arith.constant dense<0.000000e+00> : vector<32x32xf32>
    %149 = tpu.matmul %148, %120, %cst_47 {dimension_numbers = #tpu.dot_dimension_numbers<[1], [0], [0], [1], [0, 0, 1, 1], [], []>} : vector<32x48xbf16>, vector<48x32xbf16>, vector<32x32xf32> -> vector<32x32xf32>
    %150 = vector.extract_strided_slice %121 {offsets = [0, 0], sizes = [1, 32], strides = [1, 1]} : vector<2x32xf32> to vector<1x32xf32>
    %151 = vector.broadcast %150 : vector<1x32xf32> to vector<32x32xf32>
    %152 = arith.mulf %149, %151 : vector<32x32xf32>
    %153 = vector.extract_strided_slice %121 {offsets = [1, 0], sizes = [1, 32], strides = [1, 1]} : vector<2x32xf32> to vector<1x32xf32>
    %154 = vector.broadcast %153 : vector<1x32xf32> to vector<32x32xf32>
    %155 = arith.addf %152, %154 : vector<32x32xf32>
    %cst_48 = arith.constant 0.000000e+00 : f32
    %156 = vector.broadcast %cst_48 : f32 to vector<32x32xf32>
    %157 = arith.maximumf %155, %156 : vector<32x32xf32>
    %cst_49 = arith.constant dense<0.000000e+00> : vector<32x16xf32>
    %158 = tpu.matmul %119, %112, %cst_49 {dimension_numbers = #tpu.dot_dimension_numbers<[1], [0], [0], [1], [0, 0, 1, 1], [], []>} : vector<32x64xf32>, vector<64x16xf32>, vector<32x16xf32> -> vector<32x16xf32>
    %159 = arith.truncf %158 : vector<32x16xf32> to vector<32x16xbf16>
    %c0_50 = arith.constant 0 : index
    %c0_51 = arith.constant 0 : index
    %160 = vector.load %arg11[%c0_50, %c0_51] : memref<16x32xbf16, #tpu.memory_space<vmem>>, vector<16x32xbf16>
    %cst_52 = arith.constant dense<0.000000e+00> : vector<32x32xf32>
    %161 = tpu.matmul %159, %160, %cst_52 {dimension_numbers = #tpu.dot_dimension_numbers<[1], [0], [0], [1], [0, 0, 1, 1], [], []>} : vector<32x16xbf16>, vector<16x32xbf16>, vector<32x32xf32> -> vector<32x32xf32>
    %c0_53 = arith.constant 0 : index
    %c0_54 = arith.constant 0 : index
    %162 = vector.load %arg12[%c0_53, %c0_54] : memref<2x32xf32, #tpu.memory_space<vmem>>, vector<2x32xf32>
    %163 = vector.extract_strided_slice %162 {offsets = [0, 0], sizes = [1, 32], strides = [1, 1]} : vector<2x32xf32> to vector<1x32xf32>
    %164 = vector.broadcast %163 : vector<1x32xf32> to vector<32x32xf32>
    %165 = arith.mulf %161, %164 : vector<32x32xf32>
    %166 = vector.extract_strided_slice %162 {offsets = [1, 0], sizes = [1, 32], strides = [1, 1]} : vector<2x32xf32> to vector<1x32xf32>
    %167 = vector.broadcast %166 : vector<1x32xf32> to vector<32x32xf32>
    %168 = arith.addf %165, %167 : vector<32x32xf32>
    %c0_55 = arith.constant 0 : index
    %c0_56 = arith.constant 0 : index
    %169 = vector.load %arg9[%c0_55, %c0_56] : memref<96x32xbf16, #tpu.memory_space<vmem>>, vector<96x32xbf16>
    %c0_57 = arith.constant 0 : index
    %c0_58 = arith.constant 0 : index
    %170 = vector.load %arg10[%c0_57, %c0_58] : memref<2x32xf32, #tpu.memory_space<vmem>>, vector<2x32xf32>
    %cst_59 = arith.constant 0.000000e+00 : f32
    %171 = vector.broadcast %cst_59 : f32 to vector<1x32xf32>
    %172 = tpu.iota {dimensions = array<i32: 0>} : vector<32x1xi32>
    %c0_i32_60 = arith.constant 0 : i32
    %173 = vector.broadcast %c0_i32_60 : i32 to vector<32x1xi32>
    %174 = arith.cmpi eq, %172, %173 : vector<32x1xi32>
    %c16_i32 = arith.constant 16 : i32
    %175 = vector.broadcast %c16_i32 : i32 to vector<32x1xi32>
    %176 = arith.cmpi eq, %172, %175 : vector<32x1xi32>
    %177 = arith.ori %174, %176 : vector<32x1xi1>
    %c15_i32 = arith.constant 15 : i32
    %178 = vector.broadcast %c15_i32 : i32 to vector<32x1xi32>
    %179 = arith.cmpi eq, %172, %178 : vector<32x1xi32>
    %c31_i32_61 = arith.constant 31 : i32
    %180 = vector.broadcast %c31_i32_61 : i32 to vector<32x1xi32>
    %181 = arith.cmpi eq, %172, %180 : vector<32x1xi32>
    %182 = arith.ori %179, %181 : vector<32x1xi1>
    %183 = vector.extract_strided_slice %157 {offsets = [0, 0], sizes = [31, 32], strides = [1, 1]} : vector<32x32xf32> to vector<31x32xf32>
    %184 = tpu.concatenate %171, %183 in 0 : vector<1x32xf32>, vector<31x32xf32> -> vector<32x32xf32>
    %cst_62 = arith.constant 0.000000e+00 : f32
    %185 = vector.shape_cast %177 : vector<32x1xi1> to vector<32x1xi1>
    %186 = vector.broadcast %185 : vector<32x1xi1> to vector<32x32xi1>
    %187 = vector.broadcast %cst_62 : f32 to vector<32x32xf32>
    %188 = arith.select %186, %187, %184 : vector<32x32xi1>, vector<32x32xf32>
    %189 = vector.extract_strided_slice %157 {offsets = [1, 0], sizes = [31, 32], strides = [1, 1]} : vector<32x32xf32> to vector<31x32xf32>
    %190 = tpu.concatenate %189, %171 in 0 : vector<31x32xf32>, vector<1x32xf32> -> vector<32x32xf32>
    %cst_63 = arith.constant 0.000000e+00 : f32
    %191 = vector.shape_cast %182 : vector<32x1xi1> to vector<32x1xi1>
    %192 = vector.broadcast %191 : vector<32x1xi1> to vector<32x32xi1>
    %193 = vector.broadcast %cst_63 : f32 to vector<32x32xf32>
    %194 = arith.select %192, %193, %190 : vector<32x32xi1>, vector<32x32xf32>
    %195 = tpu.concatenate %188, %157, %194 in 1 : vector<32x32xf32>, vector<32x32xf32>, vector<32x32xf32> -> vector<32x96xf32>
    %196 = arith.truncf %195 : vector<32x96xf32> to vector<32x96xbf16>
    %cst_64 = arith.constant dense<0.000000e+00> : vector<32x32xf32>
    %197 = tpu.matmul %196, %169, %cst_64 {dimension_numbers = #tpu.dot_dimension_numbers<[1], [0], [0], [1], [0, 0, 1, 1], [], []>} : vector<32x96xbf16>, vector<96x32xbf16>, vector<32x32xf32> -> vector<32x32xf32>
    %198 = vector.extract_strided_slice %170 {offsets = [0, 0], sizes = [1, 32], strides = [1, 1]} : vector<2x32xf32> to vector<1x32xf32>
    %199 = vector.broadcast %198 : vector<1x32xf32> to vector<32x32xf32>
    %200 = arith.mulf %197, %199 : vector<32x32xf32>
    %201 = vector.extract_strided_slice %170 {offsets = [1, 0], sizes = [1, 32], strides = [1, 1]} : vector<2x32xf32> to vector<1x32xf32>
    %202 = vector.broadcast %201 : vector<1x32xf32> to vector<32x32xf32>
    %203 = arith.addf %200, %202 : vector<32x32xf32>
    %204 = arith.addf %203, %168 : vector<32x32xf32>
    %cst_65 = arith.constant 0.000000e+00 : f32
    %205 = vector.broadcast %cst_65 : f32 to vector<32x32xf32>
    %206 = arith.maximumf %204, %205 : vector<32x32xf32>
    %207 = tpu.iota {dimensions = array<i32: 0>} : vector<16x32xi32>
    %208 = tpu.iota {dimensions = array<i32: 1>} : vector<16x32xi32>
    %c2_i32_66 = arith.constant 2 : i32
    %209 = vector.broadcast %c2_i32_66 : i32 to vector<16x32xi32>
    %210 = arith.muli %209, %207 : vector<16x32xi32>
    %211 = arith.cmpi eq, %208, %210 : vector<16x32xi32>
    %212 = arith.extui %211 : vector<16x32xi1> to vector<16x32xi32>
    %213 = arith.sitofp %212 : vector<16x32xi32> to vector<16x32xf32>
    %c0_67 = arith.constant 0 : index
    %c0_68 = arith.constant 0 : index
    %214 = vector.load %arg13[%c0_67, %c0_68] : memref<96x64xbf16, #tpu.memory_space<vmem>>, vector<96x64xbf16>
    %c0_69 = arith.constant 0 : index
    %c0_70 = arith.constant 0 : index
    %215 = vector.load %arg14[%c0_69, %c0_70] : memref<2x64xf32, #tpu.memory_space<vmem>>, vector<2x64xf32>
    %cst_71 = arith.constant 0.000000e+00 : f32
    %216 = vector.broadcast %cst_71 : f32 to vector<1x32xf32>
    %217 = tpu.iota {dimensions = array<i32: 0>} : vector<32x1xi32>
    %c0_i32_72 = arith.constant 0 : i32
    %218 = vector.broadcast %c0_i32_72 : i32 to vector<32x1xi32>
    %219 = arith.cmpi eq, %217, %218 : vector<32x1xi32>
    %c16_i32_73 = arith.constant 16 : i32
    %220 = vector.broadcast %c16_i32_73 : i32 to vector<32x1xi32>
    %221 = arith.cmpi eq, %217, %220 : vector<32x1xi32>
    %222 = arith.ori %219, %221 : vector<32x1xi1>
    %c15_i32_74 = arith.constant 15 : i32
    %223 = vector.broadcast %c15_i32_74 : i32 to vector<32x1xi32>
    %224 = arith.cmpi eq, %217, %223 : vector<32x1xi32>
    %c31_i32_75 = arith.constant 31 : i32
    %225 = vector.broadcast %c31_i32_75 : i32 to vector<32x1xi32>
    %226 = arith.cmpi eq, %217, %225 : vector<32x1xi32>
    %227 = arith.ori %224, %226 : vector<32x1xi1>
    %228 = vector.extract_strided_slice %206 {offsets = [0, 0], sizes = [31, 32], strides = [1, 1]} : vector<32x32xf32> to vector<31x32xf32>
    %229 = tpu.concatenate %216, %228 in 0 : vector<1x32xf32>, vector<31x32xf32> -> vector<32x32xf32>
    %cst_76 = arith.constant 0.000000e+00 : f32
    %230 = vector.shape_cast %222 : vector<32x1xi1> to vector<32x1xi1>
    %231 = vector.broadcast %230 : vector<32x1xi1> to vector<32x32xi1>
    %232 = vector.broadcast %cst_76 : f32 to vector<32x32xf32>
    %233 = arith.select %231, %232, %229 : vector<32x32xi1>, vector<32x32xf32>
    %234 = vector.extract_strided_slice %206 {offsets = [1, 0], sizes = [31, 32], strides = [1, 1]} : vector<32x32xf32> to vector<31x32xf32>
    %235 = tpu.concatenate %234, %216 in 0 : vector<31x32xf32>, vector<1x32xf32> -> vector<32x32xf32>
    %cst_77 = arith.constant 0.000000e+00 : f32
    %236 = vector.shape_cast %227 : vector<32x1xi1> to vector<32x1xi1>
    %237 = vector.broadcast %236 : vector<32x1xi1> to vector<32x32xi1>
    %238 = vector.broadcast %cst_77 : f32 to vector<32x32xf32>
    %239 = arith.select %237, %238, %235 : vector<32x32xi1>, vector<32x32xf32>
    %240 = tpu.concatenate %233, %206, %239 in 1 : vector<32x32xf32>, vector<32x32xf32>, vector<32x32xf32> -> vector<32x96xf32>
    %cst_78 = arith.constant dense<0.000000e+00> : vector<16x96xf32>
    %241 = tpu.matmul %213, %240, %cst_78 {dimension_numbers = #tpu.dot_dimension_numbers<[1], [0], [0], [1], [0, 0, 1, 1], [], []>} : vector<16x32xf32>, vector<32x96xf32>, vector<16x96xf32> -> vector<16x96xf32>
    %242 = arith.truncf %241 : vector<16x96xf32> to vector<16x96xbf16>
    %cst_79 = arith.constant dense<0.000000e+00> : vector<16x64xf32>
    %243 = tpu.matmul %242, %214, %cst_79 {dimension_numbers = #tpu.dot_dimension_numbers<[1], [0], [0], [1], [0, 0, 1, 1], [], []>} : vector<16x96xbf16>, vector<96x64xbf16>, vector<16x64xf32> -> vector<16x64xf32>
    %244 = vector.extract_strided_slice %215 {offsets = [0, 0], sizes = [1, 64], strides = [1, 1]} : vector<2x64xf32> to vector<1x64xf32>
    %245 = vector.broadcast %244 : vector<1x64xf32> to vector<16x64xf32>
    %246 = arith.mulf %243, %245 : vector<16x64xf32>
    %247 = vector.extract_strided_slice %215 {offsets = [1, 0], sizes = [1, 64], strides = [1, 1]} : vector<2x64xf32> to vector<1x64xf32>
    %248 = vector.broadcast %247 : vector<1x64xf32> to vector<16x64xf32>
    %249 = arith.addf %246, %248 : vector<16x64xf32>
    %cst_80 = arith.constant 0.000000e+00 : f32
    %250 = vector.broadcast %cst_80 : f32 to vector<16x64xf32>
    %251 = arith.maximumf %249, %250 : vector<16x64xf32>
    %cst_81 = arith.constant dense<0.000000e+00> : vector<16x32xf32>
    %252 = tpu.matmul %213, %206, %cst_81 {dimension_numbers = #tpu.dot_dimension_numbers<[1], [0], [0], [1], [0, 0, 1, 1], [], []>} : vector<16x32xf32>, vector<32x32xf32>, vector<16x32xf32> -> vector<16x32xf32>
    %253 = arith.truncf %252 : vector<16x32xf32> to vector<16x32xbf16>
    %c0_82 = arith.constant 0 : index
    %c0_83 = arith.constant 0 : index
    %254 = vector.load %arg17[%c0_82, %c0_83] : memref<32x64xbf16, #tpu.memory_space<vmem>>, vector<32x64xbf16>
    %cst_84 = arith.constant dense<0.000000e+00> : vector<16x64xf32>
    %255 = tpu.matmul %253, %254, %cst_84 {dimension_numbers = #tpu.dot_dimension_numbers<[1], [0], [0], [1], [0, 0, 1, 1], [], []>} : vector<16x32xbf16>, vector<32x64xbf16>, vector<16x64xf32> -> vector<16x64xf32>
    %c0_85 = arith.constant 0 : index
    %c0_86 = arith.constant 0 : index
    %256 = vector.load %arg18[%c0_85, %c0_86] : memref<2x64xf32, #tpu.memory_space<vmem>>, vector<2x64xf32>
    %257 = vector.extract_strided_slice %256 {offsets = [0, 0], sizes = [1, 64], strides = [1, 1]} : vector<2x64xf32> to vector<1x64xf32>
    %258 = vector.broadcast %257 : vector<1x64xf32> to vector<16x64xf32>
    %259 = arith.mulf %255, %258 : vector<16x64xf32>
    %260 = vector.extract_strided_slice %256 {offsets = [1, 0], sizes = [1, 64], strides = [1, 1]} : vector<2x64xf32> to vector<1x64xf32>
    %261 = vector.broadcast %260 : vector<1x64xf32> to vector<16x64xf32>
    %262 = arith.addf %259, %261 : vector<16x64xf32>
    %c0_87 = arith.constant 0 : index
    %c0_88 = arith.constant 0 : index
    %263 = vector.load %arg15[%c0_87, %c0_88] : memref<192x64xbf16, #tpu.memory_space<vmem>>, vector<192x64xbf16>
    %c0_89 = arith.constant 0 : index
    %c0_90 = arith.constant 0 : index
    %264 = vector.load %arg16[%c0_89, %c0_90] : memref<2x64xf32, #tpu.memory_space<vmem>>, vector<2x64xf32>
    %cst_91 = arith.constant 0.000000e+00 : f32
    %265 = vector.broadcast %cst_91 : f32 to vector<1x64xf32>
    %266 = tpu.iota {dimensions = array<i32: 0>} : vector<16x1xi32>
    %c0_i32_92 = arith.constant 0 : i32
    %267 = vector.broadcast %c0_i32_92 : i32 to vector<16x1xi32>
    %268 = arith.cmpi eq, %266, %267 : vector<16x1xi32>
    %c8_i32 = arith.constant 8 : i32
    %269 = vector.broadcast %c8_i32 : i32 to vector<16x1xi32>
    %270 = arith.cmpi eq, %266, %269 : vector<16x1xi32>
    %271 = arith.ori %268, %270 : vector<16x1xi1>
    %c7_i32 = arith.constant 7 : i32
    %272 = vector.broadcast %c7_i32 : i32 to vector<16x1xi32>
    %273 = arith.cmpi eq, %266, %272 : vector<16x1xi32>
    %c15_i32_93 = arith.constant 15 : i32
    %274 = vector.broadcast %c15_i32_93 : i32 to vector<16x1xi32>
    %275 = arith.cmpi eq, %266, %274 : vector<16x1xi32>
    %276 = arith.ori %273, %275 : vector<16x1xi1>
    %277 = vector.extract_strided_slice %251 {offsets = [0, 0], sizes = [15, 64], strides = [1, 1]} : vector<16x64xf32> to vector<15x64xf32>
    %278 = tpu.concatenate %265, %277 in 0 : vector<1x64xf32>, vector<15x64xf32> -> vector<16x64xf32>
    %cst_94 = arith.constant 0.000000e+00 : f32
    %279 = vector.shape_cast %271 : vector<16x1xi1> to vector<16x1xi1>
    %280 = vector.broadcast %279 : vector<16x1xi1> to vector<16x64xi1>
    %281 = vector.broadcast %cst_94 : f32 to vector<16x64xf32>
    %282 = arith.select %280, %281, %278 : vector<16x64xi1>, vector<16x64xf32>
    %283 = vector.extract_strided_slice %251 {offsets = [1, 0], sizes = [15, 64], strides = [1, 1]} : vector<16x64xf32> to vector<15x64xf32>
    %284 = tpu.concatenate %283, %265 in 0 : vector<15x64xf32>, vector<1x64xf32> -> vector<16x64xf32>
    %cst_95 = arith.constant 0.000000e+00 : f32
    %285 = vector.shape_cast %276 : vector<16x1xi1> to vector<16x1xi1>
    %286 = vector.broadcast %285 : vector<16x1xi1> to vector<16x64xi1>
    %287 = vector.broadcast %cst_95 : f32 to vector<16x64xf32>
    %288 = arith.select %286, %287, %284 : vector<16x64xi1>, vector<16x64xf32>
    %289 = tpu.concatenate %282, %251, %288 in 1 : vector<16x64xf32>, vector<16x64xf32>, vector<16x64xf32> -> vector<16x192xf32>
    %290 = arith.truncf %289 : vector<16x192xf32> to vector<16x192xbf16>
    %cst_96 = arith.constant dense<0.000000e+00> : vector<16x64xf32>
    %291 = tpu.matmul %290, %263, %cst_96 {dimension_numbers = #tpu.dot_dimension_numbers<[1], [0], [0], [1], [0, 0, 1, 1], [], []>} : vector<16x192xbf16>, vector<192x64xbf16>, vector<16x64xf32> -> vector<16x64xf32>
    %292 = vector.extract_strided_slice %264 {offsets = [0, 0], sizes = [1, 64], strides = [1, 1]} : vector<2x64xf32> to vector<1x64xf32>
    %293 = vector.broadcast %292 : vector<1x64xf32> to vector<16x64xf32>
    %294 = arith.mulf %291, %293 : vector<16x64xf32>
    %295 = vector.extract_strided_slice %264 {offsets = [1, 0], sizes = [1, 64], strides = [1, 1]} : vector<2x64xf32> to vector<1x64xf32>
    %296 = vector.broadcast %295 : vector<1x64xf32> to vector<16x64xf32>
    %297 = arith.addf %294, %296 : vector<16x64xf32>
    %298 = arith.addf %297, %262 : vector<16x64xf32>
    %cst_97 = arith.constant 0.000000e+00 : f32
    %299 = vector.broadcast %cst_97 : f32 to vector<16x64xf32>
    %300 = arith.maximumf %298, %299 : vector<16x64xf32>
    %301 = arith.truncf %300 : vector<16x64xf32> to vector<16x64xbf16>
    %c0_98 = arith.constant 0 : index
    %c0_99 = arith.constant 0 : index
    %302 = vector.load %arg19[%c0_98, %c0_99] : memref<64x128xbf16, #tpu.memory_space<vmem>>, vector<64x128xbf16>
    %cst_100 = arith.constant dense<0.000000e+00> : vector<16x128xf32>
    %303 = tpu.matmul %301, %302, %cst_100 {dimension_numbers = #tpu.dot_dimension_numbers<[1], [0], [0], [1], [0, 0, 1, 1], [], []>} : vector<16x64xbf16>, vector<64x128xbf16>, vector<16x128xf32> -> vector<16x128xf32>
    %c0_101 = arith.constant 0 : index
    %c0_102 = arith.constant 0 : index
    %304 = vector.load %arg20[%c0_101, %c0_102] : memref<1x128xf32, #tpu.memory_space<vmem>>, vector<1x128xf32>
    %305 = vector.broadcast %304 : vector<1x128xf32> to vector<16x128xf32>
    %306 = arith.addf %303, %305 : vector<16x128xf32>
    %307 = tpu.iota {dimensions = array<i32: 0>} : vector<2x16xi32>
    %308 = tpu.iota {dimensions = array<i32: 1>} : vector<2x16xi32>
    %c8_i32_103 = arith.constant 8 : i32
    %309 = vector.broadcast %c8_i32_103 : i32 to vector<2x16xi32>
    %310 = arith.muli %307, %309 : vector<2x16xi32>
    %311 = arith.cmpi sge, %308, %310 : vector<2x16xi32>
    %c1_i32 = arith.constant 1 : i32
    %312 = vector.broadcast %c1_i32 : i32 to vector<2x16xi32>
    %313 = arith.addi %307, %312 : vector<2x16xi32>
    %c8_i32_104 = arith.constant 8 : i32
    %314 = vector.broadcast %c8_i32_104 : i32 to vector<2x16xi32>
    %315 = arith.muli %313, %314 : vector<2x16xi32>
    %316 = arith.cmpi slt, %308, %315 : vector<2x16xi32>
    %317 = arith.andi %311, %316 : vector<2x16xi1>
    %cst_105 = arith.constant 1.250000e-01 : f32
    %cst_106 = arith.constant 0.000000e+00 : f32
    %318 = vector.broadcast %cst_105 : f32 to vector<2x16xf32>
    %319 = vector.broadcast %cst_106 : f32 to vector<2x16xf32>
    %320 = arith.select %317, %318, %319 : vector<2x16xi1>, vector<2x16xf32>
    %c0_107 = arith.constant 0 : index
    %c0_108 = arith.constant 0 : index
    %321 = vector.load %arg21[%c0_107, %c0_108] : memref<16x128xf32, #tpu.memory_space<vmem>>, vector<16x128xf32>
    tpu.vector_store %arg21[%c0_107, %c0_108], %306 {strides = array<i32>} : memref<16x128xf32, #tpu.memory_space<vmem>>, vector<16x128xf32>,
    %cst_109 = arith.constant dense<0.000000e+00> : vector<2x64xf32>
    %322 = tpu.matmul %320, %300, %cst_109 {dimension_numbers = #tpu.dot_dimension_numbers<[1], [0], [0], [1], [0, 0, 1, 1], [], []>} : vector<2x16xf32>, vector<16x64xf32>, vector<2x64xf32> -> vector<2x64xf32>
    %c0_110 = arith.constant 0 : index
    %c0_111 = arith.constant 0 : index
    %323 = vector.load %arg22[%c0_110, %c0_111] : memref<2x64xf32, #tpu.memory_space<vmem>>, vector<2x64xf32>
    tpu.vector_store %arg22[%c0_110, %c0_111], %322 {strides = array<i32>} : memref<2x64xf32, #tpu.memory_space<vmem>>, vector<2x64xf32>,
    %cst_112 = arith.constant dense<0.000000e+00> : vector<2x128xf32>
    %324 = tpu.matmul %320, %306, %cst_112 {dimension_numbers = #tpu.dot_dimension_numbers<[1], [0], [0], [1], [0, 0, 1, 1], [], []>} : vector<2x16xf32>, vector<16x128xf32>, vector<2x128xf32> -> vector<2x128xf32>
    %c0_113 = arith.constant 0 : index
    %c0_114 = arith.constant 0 : index
    %325 = vector.load %arg23[%c0_113, %c0_114] : memref<2x128xf32, #tpu.memory_space<vmem>>, vector<2x128xf32>
    tpu.vector_store %arg23[%c0_113, %c0_114], %324 {strides = array<i32>} : memref<2x128xf32, #tpu.memory_space<vmem>>, vector<2x128xf32>,
    return
  }
}

</mosaic_0001>

<llo_original>
// kernel: resnet_forward.1
$region0: #{resnet_forward.1}
  #allocation0 [shape = 'u32[]', space=smem, size = 0x4, offset = 0x4, fixed_abs, tag = 'smem constant byte address 0x4 - core index']
  #allocation1 [shape = 'u32[144,128]{1,0:T(1,128)}', space=vmem, size = 0x12000, scoped, tag = 'internal scratch']
  %s0 = inlined_call_operand.vmem [shape: f32[64,2], index: 0, kind: input, shape index: {}]
  %s1 = inlined_call_operand.vmem [shape: bf16[6,16], index: 1, kind: input, shape index: {}]
  %s2 = inlined_call_operand.vmem [shape: f32[2,16], index: 2, kind: input, shape index: {}]
  %s3 = inlined_call_operand.vmem [shape: bf16[48,16], index: 3, kind: input, shape index: {}]
  %s4 = inlined_call_operand.vmem [shape: f32[2,16], index: 4, kind: input, shape index: {}]
  %s5 = inlined_call_operand.vmem [shape: bf16[48,16], index: 5, kind: input, shape index: {}]
  %s6 = inlined_call_operand.vmem [shape: f32[2,16], index: 6, kind: input, shape index: {}]
  %s7 = inlined_call_operand.vmem [shape: bf16[48,32], index: 7, kind: input, shape index: {}]
  %s8 = inlined_call_operand.vmem [shape: f32[2,32], index: 8, kind: input, shape index: {}]
  %s9 = inlined_call_operand.vmem [shape: bf16[96,32], index: 9, kind: input, shape index: {}]
  %s10 = inlined_call_operand.vmem [shape: f32[2,32], index: 10, kind: input, shape index: {}]
  %s11 = inlined_call_operand.vmem [shape: bf16[16,32], index: 11, kind: input, shape index: {}]
  %s12 = inlined_call_operand.vmem [shape: f32[2,32], index: 12, kind: input, shape index: {}]
  %s13 = inlined_call_operand.vmem [shape: bf16[96,64], index: 13, kind: input, shape index: {}]
  %s14 = inlined_call_operand.vmem [shape: f32[2,64], index: 14, kind: input, shape index: {}]
  %s15 = inlined_call_operand.vmem [shape: bf16[192,64], index: 15, kind: input, shape index: {}]
  %s16 = inlined_call_operand.vmem [shape: f32[2,64], index: 16, kind: input, shape index: {}]
  %s17 = inlined_call_operand.vmem [shape: bf16[32,64], index: 17, kind: input, shape index: {}]
  %s18 = inlined_call_operand.vmem [shape: f32[2,64], index: 18, kind: input, shape index: {}]
  %s19 = inlined_call_operand.vmem [shape: bf16[64,128], index: 19, kind: input, shape index: {}]
  %s20 = inlined_call_operand.vmem [shape: f32[1,128], index: 20, kind: input, shape index: {}]
  %s21 = inlined_call_operand.vmem [shape: f32[16,128], index: 21, kind: output, shape index: {0}]
  %s22 = inlined_call_operand.hbm [shape: f32[2,64], index: 22, kind: output, shape index: {1}]
  %s23 = inlined_call_operand.hbm [shape: f32[2,128], index: 23, kind: output, shape index: {2}]
  %24 = xla_tuple %s21, %s22, %s23
  %s25 = sld [smem:[#allocation0]]
  $region110: #{resnet_forward.1} parent=0
    _
  %s27 = ssub.s32 1, %s25
  %s28 = scalar_select 0, %s27, %s25
  $region1: #{resnet_forward.1} parent=0
    #allocation2 [shape = 'u8[1024]{0}', space=vmem, size = 0x400, scoped, tag = 'output window, operand 1, single buffered']
    #allocation3 [shape = 's32[1]{0}', space=sflag, size = 0x4, scoped, tag = 'scoped memory for resnet_forward.1']
    #allocation4 [shape = 'u8[1024]{0}', space=vmem, size = 0x400, scoped, tag = 'output window, operand 2, single buffered']
    #allocation5 [shape = 's32[1]{0}', space=sflag, size = 0x4, scoped, tag = 'scoped memory for resnet_forward.1']
    %29 = vsyncpa [#allocation3], 0
    %30 = vsyncpa [#allocation5], 0
    // Predicated region
    $region2: #{resnet_forward.1} parent=1 // pred_check
      _
    $region3: #{resnet_forward.1} parent=1 // pred_check_branch
      %32 = sbr.rel (0) target = $region5
    $region4: #{resnet_forward.1} parent=1 // pred_region
      _
    $region5: #{resnet_forward.1} parent=1 // pred_fallthru
      _
    // Predicated region
    $region6: #{resnet_forward.1} parent=1 // pred_check
      _
    $region7: #{resnet_forward.1} parent=1 // pred_check_branch
      %34 = sbr.rel (0) target = $region9
    $region8: #{resnet_forward.1} parent=1 // pred_region
      _
    $region9: #{resnet_forward.1} parent=1 // pred_fallthru
      _
    // Predicated region
    $region10: #{resnet_forward.1} parent=1 // pred_check
      _
    $region11: #{resnet_forward.1} parent=1 // pred_check_branch
      %36 = sbr.rel (0) target = $region13
    $region12: #{resnet_forward.1} parent=1 // pred_region
      _
    $region13: #{resnet_forward.1} parent=1 // pred_fallthru
      _
    // Predicated region
    $region14: #{resnet_forward.1} parent=1 // pred_check
      _
    $region15: #{resnet_forward.1} parent=1 // pred_check_branch
      %38 = sbr.rel (0) target = $region17
    $region16: #{resnet_forward.1} parent=1 // pred_region
      _
    $region17: #{resnet_forward.1} parent=1 // pred_fallthru
      _
    // Predicated region
    $region18: #{resnet_forward.1} parent=1 // pred_check
      _
    $region19: #{resnet_forward.1} parent=1 // pred_check_branch
      %40 = sbr.rel (0) target = $region21
    $region20: #{resnet_forward.1} parent=1 // pred_region
      _
    $region21: #{resnet_forward.1} parent=1 // pred_fallthru
      _
    // Predicated region
    $region22: #{resnet_forward.1} parent=1 // pred_check
      _
    $region23: #{resnet_forward.1} parent=1 // pred_check_branch
      %42 = sbr.rel (0) target = $region25
    $region24: #{resnet_forward.1} parent=1 // pred_region
      _
    $region25: #{resnet_forward.1} parent=1 // pred_fallthru
      _
    // Predicated region
    $region26: #{resnet_forward.1} parent=1 // pred_check
      _
    $region27: #{resnet_forward.1} parent=1 // pred_check_branch
      %44 = sbr.rel (0) target = $region29
    $region28: #{resnet_forward.1} parent=1 // pred_region
      _
    $region29: #{resnet_forward.1} parent=1 // pred_fallthru
      _
    // Predicated region
    $region30: #{resnet_forward.1} parent=1 // pred_check
      _
    $region31: #{resnet_forward.1} parent=1 // pred_check_branch
      %46 = sbr.rel (0) target = $region33
    $region32: #{resnet_forward.1} parent=1 // pred_region
      _
    $region33: #{resnet_forward.1} parent=1 // pred_fallthru
      _
    // Predicated region
    $region34: #{resnet_forward.1} parent=1 // pred_check
      _
    $region35: #{resnet_forward.1} parent=1 // pred_check_branch
      %48 = sbr.rel (0) target = $region37
    $region36: #{resnet_forward.1} parent=1 // pred_region
      _
    $region37: #{resnet_forward.1} parent=1 // pred_fallthru
      _
    // Predicated region
    $region38: #{resnet_forward.1} parent=1 // pred_check
      _
    $region39: #{resnet_forward.1} parent=1 // pred_check_branch
      %50 = sbr.rel (0) target = $region41
    $region40: #{resnet_forward.1} parent=1 // pred_region
      _
    $region41: #{resnet_forward.1} parent=1 // pred_fallthru
      _
    // Predicated region
    $region42: #{resnet_forward.1} parent=1 // pred_check
      _
    $region43: #{resnet_forward.1} parent=1 // pred_check_branch
      %52 = sbr.rel (0) target = $region45
    $region44: #{resnet_forward.1} parent=1 // pred_region
      _
    $region45: #{resnet_forward.1} parent=1 // pred_fallthru
      _
    // Predicated region
    $region46: #{resnet_forward.1} parent=1 // pred_check
      _
    $region47: #{resnet_forward.1} parent=1 // pred_check_branch
      %54 = sbr.rel (0) target = $region49
    $region48: #{resnet_forward.1} parent=1 // pred_region
      _
    $region49: #{resnet_forward.1} parent=1 // pred_fallthru
      _
    // Predicated region
    $region50: #{resnet_forward.1} parent=1 // pred_check
      _
    $region51: #{resnet_forward.1} parent=1 // pred_check_branch
      %56 = sbr.rel (0) target = $region53
    $region52: #{resnet_forward.1} parent=1 // pred_region
      _
    $region53: #{resnet_forward.1} parent=1 // pred_fallthru
      _
    // Predicated region
    $region54: #{resnet_forward.1} parent=1 // pred_check
      _
    $region55: #{resnet_forward.1} parent=1 // pred_check_branch
      %58 = sbr.rel (0) target = $region57
    $region56: #{resnet_forward.1} parent=1 // pred_region
      _
    $region57: #{resnet_forward.1} parent=1 // pred_fallthru
      _
    // Predicated region
    $region58: #{resnet_forward.1} parent=1 // pred_check
      _
    $region59: #{resnet_forward.1} parent=1 // pred_check_branch
      %60 = sbr.rel (0) target = $region61
    $region60: #{resnet_forward.1} parent=1 // pred_region
      _
    $region61: #{resnet_forward.1} parent=1 // pred_fallthru
      _
    // Predicated region
    $region62: #{resnet_forward.1} parent=1 // pred_check
      _
    $region63: #{resnet_forward.1} parent=1 // pred_check_branch
      %62 = sbr.rel (0) target = $region65
    $region64: #{resnet_forward.1} parent=1 // pred_region
      _
    $region65: #{resnet_forward.1} parent=1 // pred_fallthru
      _
    // Predicated region
    $region66: #{resnet_forward.1} parent=1 // pred_check
      _
    $region67: #{resnet_forward.1} parent=1 // pred_check_branch
      %64 = sbr.rel (0) target = $region69
    $region68: #{resnet_forward.1} parent=1 // pred_region
      _
    $region69: #{resnet_forward.1} parent=1 // pred_fallthru
      _
    // Predicated region
    $region70: #{resnet_forward.1} parent=1 // pred_check
      _
    $region71: #{resnet_forward.1} parent=1 // pred_check_branch
      %66 = sbr.rel (0) target = $region73
    $region72: #{resnet_forward.1} parent=1 // pred_region
      _
    $region73: #{resnet_forward.1} parent=1 // pred_fallthru
      _
    // Predicated region
    $region74: #{resnet_forward.1} parent=1 // pred_check
      _
    $region75: #{resnet_forward.1} parent=1 // pred_check_branch
      %68 = sbr.rel (0) target = $region77
    $region76: #{resnet_forward.1} parent=1 // pred_region
      _
    $region77: #{resnet_forward.1} parent=1 // pred_fallthru
      _
    // Predicated region
    $region78: #{resnet_forward.1} parent=1 // pred_check
      _
    $region79: #{resnet_forward.1} parent=1 // pred_check_branch
      %70 = sbr.rel (0) target = $region81
    $region80: #{resnet_forward.1} parent=1 // pred_region
      _
    $region81: #{resnet_forward.1} parent=1 // pred_fallthru
      _
    // Predicated region
    $region82: #{resnet_forward.1} parent=1 // pred_check
      _
    $region83: #{resnet_forward.1} parent=1 // pred_check_branch
      %72 = sbr.rel (0) target = $region85
    $region84: #{resnet_forward.1} parent=1 // pred_region
      _
    $region85: #{resnet_forward.1} parent=1 // pred_fallthru
      _
    %v74 = vld [vmem:[%s0] sm:$0xff]
    %v75 = vld [vmem:[%s0 + $0x8] sm:$0xff]
    %v76 = vld [vmem:[%s0 + $0x10] sm:$0xff]
    %v77 = vld [vmem:[%s0 + $0x18] sm:$0xff]
    %v78 = vld [vmem:[%s0 + $0x20] sm:$0xff]
    %v79 = vld [vmem:[%s0 + $0x28] sm:$0xff]
    %v80 = vld [vmem:[%s0 + $0x30] sm:$0xff]
    %v81 = vld [vmem:[%s0 + $0x38] sm:$0xff]
    %v82 = vld [vmem:[%s1] sm:$0x7]
    %v83 = vld [vmem:[%s2] sm:$0x3]
    %v84 = vlaneseq
    %v85 = vshrl.u32 %v84, 7
    %v86 = vadd.s32 %v85, 8
    %v87 = vadd.s32 %v85, 16
    %v88 = vadd.s32 %v85, 24
    %v89 = vadd.s32 %v85, 32
    %v90 = vadd.s32 %v85, 40
    %v91 = vadd.s32 %v85, 48
    %v92 = vadd.s32 %v85, 56
    %vm93 = vcmp.eq.s32.totalorder %v85, 0
    %vm94 = vcmp.eq.s32.totalorder %v86, 0
    %vm95 = vcmp.eq.s32.totalorder %v87, 0
    %vm96 = vcmp.eq.s32.totalorder %v88, 0
    %vm97 = vcmp.eq.s32.totalorder %v89, 0
    %vm98 = vcmp.eq.s32.totalorder %v90, 0
    %vm99 = vcmp.eq.s32.totalorder %v91, 0
    %vm100 = vcmp.eq.s32.totalorder %v92, 0
    %vm101 = vcmp.eq.s32.totalorder %v85, 32
    %vm102 = vcmp.eq.s32.totalorder %v86, 32
    %vm103 = vcmp.eq.s32.totalorder %v87, 32
    %vm104 = vcmp.eq.s32.totalorder %v88, 32
    %vm105 = vcmp.eq.s32.totalorder %v89, 32
    %vm106 = vcmp.eq.s32.totalorder %v90, 32
    %vm107 = vcmp.eq.s32.totalorder %v91, 32
    %vm108 = vcmp.eq.s32.totalorder %v92, 32
    %vm109 = vmor %vm93, %vm101
    %vm110 = vmor %vm94, %vm102
    %vm111 = vmor %vm95, %vm103
    %vm112 = vmor %vm96, %vm104
    %vm113 = vmor %vm97, %vm105
    %vm114 = vmor %vm98, %vm106
    %vm115 = vmor %vm99, %vm107
    %vm116 = vmor %vm100, %vm108
    %vm117 = vcmp.eq.s32.totalorder %v85, 31
    %vm118 = vcmp.eq.s32.totalorder %v86, 31
    %vm119 = vcmp.eq.s32.totalorder %v87, 31
    %vm120 = vcmp.eq.s32.totalorder %v88, 31
    %vm121 = vcmp.eq.s32.totalorder %v89, 31
    %vm122 = vcmp.eq.s32.totalorder %v90, 31
    %vm123 = vcmp.eq.s32.totalorder %v91, 31
    %vm124 = vcmp.eq.s32.totalorder %v92, 31
    %vm125 = vcmp.eq.s32.totalorder %v85, 63
    %vm126 = vcmp.eq.s32.totalorder %v86, 63
    %vm127 = vcmp.eq.s32.totalorder %v87, 63
    %vm128 = vcmp.eq.s32.totalorder %v88, 63
    %vm129 = vcmp.eq.s32.totalorder %v89, 63
    %vm130 = vcmp.eq.s32.totalorder %v90, 63
    %vm131 = vcmp.eq.s32.totalorder %v91, 63
    %vm132 = vcmp.eq.s32.totalorder %v92, 63
    %vm133 = vmor %vm117, %vm125
    %vm134 = vmor %vm118, %vm126
    %vm135 = vmor %vm119, %vm127
    %vm136 = vmor %vm120, %vm128
    %vm137 = vmor %vm121, %vm129
    %vm138 = vmor %vm122, %vm130
    %vm139 = vmor %vm123, %vm131
    %vm140 = vmor %vm124, %vm132
    %vm149 = vcmask 1040384
    %v150 = vrot.slane %v74, 7
    %v151 = vrot.slane %v75, 7
    %v152 = vsel %vm149, %v150, %v151
    %v153 = vrot.slane %v76, 7
    %v154 = vsel %vm149, %v151, %v153
    %v155 = vrot.slane %v77, 7
    %v156 = vsel %vm149, %v153, %v155
    %v157 = vrot.slane %v78, 7
    %v158 = vsel %vm149, %v155, %v157
    %v159 = vrot.slane %v79, 7
    %v160 = vsel %vm149, %v157, %v159
    %v161 = vrot.slane %v80, 7
    %v162 = vsel %vm149, %v159, %v161
    %v163 = vrot.slane %v81, 7
    %v164 = vsel %vm149, %v161, %v163
    %v173 = vsel %vm149, 0.0, %v150
    %v174 = vsel %vm109, 1, 0
    %v175 = vsel %vm110, 1, 0
    %v176 = vsel %vm111, 1, 0
    %v177 = vsel %vm112, 1, 0
    %v178 = vsel %vm113, 1, 0
    %v179 = vsel %vm114, 1, 0
    %v180 = vsel %vm115, 1, 0
    %v181 = vsel %vm116, 1, 0
    %vm182 = vcmp.eq.s32.totalorder %v174, 1
    %vm183 = vcmp.eq.s32.totalorder %v175, 1
    %vm184 = vcmp.eq.s32.totalorder %v176, 1
    %vm185 = vcmp.eq.s32.totalorder %v177, 1
    %vm186 = vcmp.eq.s32.totalorder %v178, 1
    %vm187 = vcmp.eq.s32.totalorder %v179, 1
    %vm188 = vcmp.eq.s32.totalorder %v180, 1
    %vm189 = vcmp.eq.s32.totalorder %v181, 1
    %v190 = vsel %vm182, 0.0, %v173
    %v191 = vsel %vm183, 0.0, %v152
    %v192 = vsel %vm184, 0.0, %v154
    %v193 = vsel %vm185, 0.0, %v156
    %v194 = vsel %vm186, 0.0, %v158
    %v195 = vsel %vm187, 0.0, %v160
    %v196 = vsel %vm188, 0.0, %v162
    %v197 = vsel %vm189, 0.0, %v164
    %vm198 = vcmask 1046528
    %v199 = vrot.slane %v74, 1
    %v200 = vrot.slane %v75, 1
    %v201 = vsel %vm198, %v199, %v200
    %v202 = vrot.slane %v76, 1
    %v203 = vsel %vm198, %v200, %v202
    %v204 = vrot.slane %v77, 1
    %v205 = vsel %vm198, %v202, %v204
    %v206 = vrot.slane %v78, 1
    %v207 = vsel %vm198, %v204, %v206
    %v208 = vrot.slane %v79, 1
    %v209 = vsel %vm198, %v206, %v208
    %v210 = vrot.slane %v80, 1
    %v211 = vsel %vm198, %v208, %v210
    %v212 = vrot.slane %v81, 1
    %v213 = vsel %vm198, %v210, %v212
    %v222 = vsel %vm198, %v212, 0.0
    %v223 = vsel %vm133, 1, 0
    %v224 = vsel %vm134, 1, 0
    %v225 = vsel %vm135, 1, 0
    %v226 = vsel %vm136, 1, 0
    %v227 = vsel %vm137, 1, 0
    %v228 = vsel %vm138, 1, 0
    %v229 = vsel %vm139, 1, 0
    %v230 = vsel %vm140, 1, 0
    %vm231 = vcmp.eq.s32.totalorder %v223, 1
    %vm232 = vcmp.eq.s32.totalorder %v224, 1
    %vm233 = vcmp.eq.s32.totalorder %v225, 1
    %vm234 = vcmp.eq.s32.totalorder %v226, 1
    %vm235 = vcmp.eq.s32.totalorder %v227, 1
    %vm236 = vcmp.eq.s32.totalorder %v228, 1
    %vm237 = vcmp.eq.s32.totalorder %v229, 1
    %vm238 = vcmp.eq.s32.totalorder %v230, 1
    %v239 = vsel %vm231, 0.0, %v201
    %v240 = vsel %vm232, 0.0, %v203
    %v241 = vsel %vm233, 0.0, %v205
    %v242 = vsel %vm234, 0.0, %v207
    %v243 = vsel %vm235, 0.0, %v209
    %v244 = vsel %vm236, 0.0, %v211
    %v245 = vsel %vm237, 0.0, %v213
    %v246 = vsel %vm238, 0.0, %v222
    %247 = vrot.lane.b32.xlu0 %v74, 2
    %v248 = vpop.permute.xlu0 %247
    %249 = vrot.lane.b32.xlu0 %v75, 2
    %v250 = vpop.permute.xlu0 %249
    %251 = vrot.lane.b32.xlu0 %v76, 2
    %v252 = vpop.permute.xlu0 %251
    %253 = vrot.lane.b32.xlu0 %v77, 2
    %v254 = vpop.permute.xlu0 %253
    %255 = vrot.lane.b32.xlu0 %v78, 2
    %v256 = vpop.permute.xlu0 %255
    %257 = vrot.lane.b32.xlu0 %v79, 2
    %v258 = vpop.permute.xlu0 %257
    %259 = vrot.lane.b32.xlu0 %v80, 2
    %v260 = vpop.permute.xlu0 %259
    %261 = vrot.lane.b32.xlu0 %v81, 2
    %v262 = vpop.permute.xlu0 %261
    %279 = vrot.lane.b32.xlu0 %v239, 4
    %v280 = vpop.permute.xlu0 %279
    %281 = vrot.lane.b32.xlu0 %v240, 4
    %v282 = vpop.permute.xlu0 %281
    %283 = vrot.lane.b32.xlu0 %v241, 4
    %v284 = vpop.permute.xlu0 %283
    %285 = vrot.lane.b32.xlu0 %v242, 4
    %v286 = vpop.permute.xlu0 %285
    %287 = vrot.lane.b32.xlu0 %v243, 4
    %v288 = vpop.permute.xlu0 %287
    %289 = vrot.lane.b32.xlu0 %v244, 4
    %v290 = vpop.permute.xlu0 %289
    %291 = vrot.lane.b32.xlu0 %v245, 4
    %v292 = vpop.permute.xlu0 %291
    %293 = vrot.lane.b32.xlu0 %v246, 4
    %v294 = vpop.permute.xlu0 %293
    %vm303 = vcmask 15360
    %v304 = vsel %vm303, %v190, %v248
    %v305 = vsel %vm303, %v191, %v250
    %v306 = vsel %vm303, %v192, %v252
    %v307 = vsel %vm303, %v193, %v254
    %v308 = vsel %vm303, %v194, %v256
    %v309 = vsel %vm303, %v195, %v258
    %v310 = vsel %vm303, %v196, %v260
    %v311 = vsel %vm303, %v197, %v262
    %vm312 = vcmask 31744
    %v313 = vsel %vm312, %v304, %v280
    %v314 = vsel %vm312, %v305, %v282
    %v315 = vsel %vm312, %v306, %v284
    %v316 = vsel %vm312, %v307, %v286
    %v317 = vsel %vm312, %v308, %v288
    %v318 = vsel %vm312, %v309, %v290
    %v319 = vsel %vm312, %v310, %v292
    %v320 = vsel %vm312, %v311, %v294
    %v321 = vpack.c.bf16 %v314, %v313
    %v322 = vpack.c.bf16 %v316, %v315
    %v323 = vpack.c.bf16 %v318, %v317
    %v324 = vpack.c.bf16 %v320, %v319
    %vm325 = vcmask 48128
    %v327 = vsel %vm325, %v321, 0
    %v330 = vsel %vm325, %v322, 0
    %v333 = vsel %vm325, %v323, 0
    %v336 = vsel %vm325, %v324, 0
    %vm338 = vcmask 1042432
    %v340 = vsel %vm338, %v82, 0
    %342 = vmatprep.subr.bf16.mxu0 0
    %343 = vmatpush1.bf16.msra.mxu0 %v340
    %344 = vmatprep.subr.bf16.mxu0 0
    %345 = vmatpush1.bf16.msra.mxu0 0
    %346 = vmatprep.subr.bf16.mxu0 0
    %347 = vmatpush1.bf16.msra.mxu0 0
    %348 = vmatprep.subr.bf16.mxu0 0
    %349 = vmatpush1.bf16.msra.mxu0 0
    %350 = vmatprep.subr.bf16.mxu0 0
    %351 = vmatpush1.bf16.msra.mxu0 0
    %352 = vmatprep.subr.bf16.mxu0 0
    %353 = vmatpush1.bf16.msra.mxu0 0
    %354 = vmatprep.subr.bf16.mxu0 0
    %355 = vmatpush1.bf16.msra.mxu0 0
    %356 = vmatprep.subr.bf16.mxu0 0
    %357 = vmatpush1.bf16.msra.mxu0 0
    %358 = vmatprep.subr.bf16.mxu0 0
    %359 = vmatpush1.bf16.msra.mxu0 0
    %360 = vmatprep.subr.bf16.mxu0 0
    %361 = vmatpush1.bf16.msra.mxu0 0
    %362 = vmatprep.subr.bf16.mxu0 0
    %363 = vmatpush1.bf16.msra.mxu0 0
    %364 = vmatprep.subr.bf16.mxu0 0
    %365 = vmatpush1.bf16.msra.mxu0 0
    %366 = vmatprep.subr.bf16.mxu0 0
    %367 = vmatpush1.bf16.msra.mxu0 0
    %368 = vmatprep.subr.bf16.mxu0 0
    %369 = vmatpush1.bf16.msra.mxu0 0
    %370 = vmatprep.subr.bf16.mxu0 0
    %371 = vmatpush1.bf16.msra.mxu0 0
    %372 = vmatprep.subr.bf16.mxu0 0
    %373 = vmatpush1.bf16.msra.mxu0 0
    %374 = vmatprep.mubr.bf16.mxu0 0
    %375 = vmatmul.mubr.bf16.gmra.mrb[0].mxu0 %v327
    %v376 = vpop.f32.mrb[0].mxu0
    %v377 = vadd.f32 0.0, %v376
    %v378 = vpop.f32.mrb[0].mxu0
    %v379 = vpop.f32.mrb[0].mxu0
    %v380 = vadd.f32 0.0, %v379
    %v381 = vpop.f32.mrb[0].mxu0
    %382 = vmatprep.mubr.bf16.mxu0 0
    %383 = vmatmul.mubr.bf16.gmra.mrb[0].mxu0 %v330
    %v384 = vpop.f32.mrb[0].mxu0
    %v385 = vadd.f32 0.0, %v384
    %v386 = vpop.f32.mrb[0].mxu0
    %v387 = vpop.f32.mrb[0].mxu0
    %v388 = vadd.f32 0.0, %v387
    %v389 = vpop.f32.mrb[0].mxu0
    %390 = vmatprep.mubr.bf16.mxu0 0
    %391 = vmatmul.mubr.bf16.gmra.mrb[0].mxu0 %v333
    %v392 = vpop.f32.mrb[0].mxu0
    %v393 = vadd.f32 0.0, %v392
    %v394 = vpop.f32.mrb[0].mxu0
    %v395 = vpop.f32.mrb[0].mxu0
    %v396 = vadd.f32 0.0, %v395
    %v397 = vpop.f32.mrb[0].mxu0
    %398 = vmatprep.mubr.bf16.mxu0 0
    %399 = vmatmul.mubr.bf16.gmra.mrb[0].mxu0 %v336
    %v400 = vpop.f32.mrb[0].mxu0
    %v401 = vadd.f32 0.0, %v400
    %v402 = vpop.f32.mrb[0].mxu0
    %v403 = vpop.f32.mrb[0].mxu0
    %v404 = vadd.f32 0.0, %v403
    %v405 = vpop.f32.mrb[0].mxu0
    %406 = vdwg.mxu0
    %v407 = vlaneseq
    %v408 = vshrl.u32 %v407, 7
    %v409 = vsub.s32 0, %v408
    %v410 = vrot.slane %v83, %v409
    %v411 = vmul.f32 %v377, %v410
    %v412 = vmul.f32 %v380, %v410
    %v413 = vmul.f32 %v385, %v410
    %v414 = vmul.f32 %v388, %v410
    %v415 = vmul.f32 %v393, %v410
    %v416 = vmul.f32 %v396, %v410
    %v417 = vmul.f32 %v401, %v410
    %v418 = vmul.f32 %v404, %v410
    %v419 = vlaneseq
    %v420 = vshrl.u32 %v419, 7
    %v421 = vsub.s32 1, %v420
    %v422 = vrot.slane %v83, %v421
    %v423 = vadd.f32 %v411, %v422
    %v424 = vadd.f32 %v412, %v422
    %v425 = vadd.f32 %v413, %v422
    %v426 = vadd.f32 %v414, %v422
    %v427 = vadd.f32 %v415, %v422
    %v428 = vadd.f32 %v416, %v422
    %v429 = vadd.f32 %v417, %v422
    %v430 = vadd.f32 %v418, %v422
    %v431 = vmax.f32 %v423, 0.0
    %v432 = vmax.f32 %v424, 0.0
    %v433 = vmax.f32 %v425, 0.0
    %v434 = vmax.f32 %v426, 0.0
    %v435 = vmax.f32 %v427, 0.0
    %v436 = vmax.f32 %v428, 0.0
    %v437 = vmax.f32 %v429, 0.0
    %v438 = vmax.f32 %v430, 0.0
    %v439 = vld [vmem:[%s3] sm:$0xf]
    %v440 = vld [vmem:[%s3 + $0x4] sm:$0xf]
    %v441 = vld [vmem:[%s3 + $0x8] sm:$0xf]
    %v442 = vld [vmem:[%s3 + $0xc] sm:$0xf]
    %v443 = vld [vmem:[%s3 + $0x10] sm:$0xf]
    %v444 = vld [vmem:[%s3 + $0x14] sm:$0xf]
    %v445 = vld [vmem:[%s4] sm:$0x3]
    %v454 = vrot.slane %v431, 7
    %v455 = vrot.slane %v432, 7
    %v456 = vsel %vm149, %v454, %v455
    %v457 = vrot.slane %v433, 7
    %v458 = vsel %vm149, %v455, %v457
    %v459 = vrot.slane %v434, 7
    %v460 = vsel %vm149, %v457, %v459
    %v461 = vrot.slane %v435, 7
    %v462 = vsel %vm149, %v459, %v461
    %v463 = vrot.slane %v436, 7
    %v464 = vsel %vm149, %v461, %v463
    %v465 = vrot.slane %v437, 7
    %v466 = vsel %vm149, %v463, %v465
    %v467 = vrot.slane %v438, 7
    %v468 = vsel %vm149, %v465, %v467
    %v477 = vsel %vm149, 0.0, %v454
    %v478 = vsel %vm182, 0.0, %v477
    %v479 = vsel %vm183, 0.0, %v456
    %v480 = vsel %vm184, 0.0, %v458
    %v481 = vsel %vm185, 0.0, %v460
    %v482 = vsel %vm186, 0.0, %v462
    %v483 = vsel %vm187, 0.0, %v464
    %v484 = vsel %vm188, 0.0, %v466
    %v485 = vsel %vm189, 0.0, %v468
    %v486 = vrot.slane %v431, 1
    %v487 = vrot.slane %v432, 1
    %v488 = vsel %vm198, %v486, %v487
    %v489 = vrot.slane %v433, 1
    %v490 = vsel %vm198, %v487, %v489
    %v491 = vrot.slane %v434, 1
    %v492 = vsel %vm198, %v489, %v491
    %v493 = vrot.slane %v435, 1
    %v494 = vsel %vm198, %v491, %v493
    %v495 = vrot.slane %v436, 1
    %v496 = vsel %vm198, %v493, %v495
    %v497 = vrot.slane %v437, 1
    %v498 = vsel %vm198, %v495, %v497
    %v499 = vrot.slane %v438, 1
    %v500 = vsel %vm198, %v497, %v499
    %v509 = vsel %vm198, %v499, 0.0
    %v510 = vsel %vm231, 0.0, %v488
    %v511 = vsel %vm232, 0.0, %v490
    %v512 = vsel %vm233, 0.0, %v492
    %v513 = vsel %vm234, 0.0, %v494
    %v514 = vsel %vm235, 0.0, %v496
    %v515 = vsel %vm236, 0.0, %v498
    %v516 = vsel %vm237, 0.0, %v500
    %v517 = vsel %vm238, 0.0, %v509
    %518 = vrot.lane.b32.xlu0 %v431, 16
    %v519 = vpop.permute.xlu0 %518
    %520 = vrot.lane.b32.xlu0 %v432, 16
    %v521 = vpop.permute.xlu0 %520
    %522 = vrot.lane.b32.xlu0 %v433, 16
    %v523 = vpop.permute.xlu0 %522
    %524 = vrot.lane.b32.xlu0 %v434, 16
    %v525 = vpop.permute.xlu0 %524
    %526 = vrot.lane.b32.xlu0 %v435, 16
    %v527 = vpop.permute.xlu0 %526
    %528 = vrot.lane.b32.xlu0 %v436, 16
    %v529 = vpop.permute.xlu0 %528
    %530 = vrot.lane.b32.xlu0 %v437, 16
    %v531 = vpop.permute.xlu0 %530
    %532 = vrot.lane.b32.xlu0 %v438, 16
    %v533 = vpop.permute.xlu0 %532
    %550 = vrot.lane.b32.xlu0 %v510, 32
    %v551 = vpop.permute.xlu0 %550
    %552 = vrot.lane.b32.xlu0 %v511, 32
    %v553 = vpop.permute.xlu0 %552
    %554 = vrot.lane.b32.xlu0 %v512, 32
    %v555 = vpop.permute.xlu0 %554
    %556 = vrot.lane.b32.xlu0 %v513, 32
    %v557 = vpop.permute.xlu0 %556
    %558 = vrot.lane.b32.xlu0 %v514, 32
    %v559 = vpop.permute.xlu0 %558
    %560 = vrot.lane.b32.xlu0 %v515, 32
    %v561 = vpop.permute.xlu0 %560
    %562 = vrot.lane.b32.xlu0 %v516, 32
    %v563 = vpop.permute.xlu0 %562
    %564 = vrot.lane.b32.xlu0 %v517, 32
    %v565 = vpop.permute.xlu0 %564
    %vm574 = vcmask 130048
    %v575 = vsel %vm574, %v478, %v519
    %v576 = vsel %vm574, %v479, %v521
    %v577 = vsel %vm574, %v480, %v523
    %v578 = vsel %vm574, %v481, %v525
    %v579 = vsel %vm574, %v482, %v527
    %v580 = vsel %vm574, %v483, %v529
    %v581 = vsel %vm574, %v484, %v531
    %v582 = vsel %vm574, %v485, %v533
    %vm583 = vcmask 261120
    %v584 = vsel %vm583, %v575, %v551
    %v585 = vsel %vm583, %v576, %v553
    %v586 = vsel %vm583, %v577, %v555
    %v587 = vsel %vm583, %v578, %v557
    %v588 = vsel %vm583, %v579, %v559
    %v589 = vsel %vm583, %v580, %v561
    %v590 = vsel %vm583, %v581, %v563
    %v591 = vsel %vm583, %v582, %v565
    %v592 = vpack.c.bf16 %v585, %v584
    %v593 = vpack.c.bf16 %v587, %v586
    %v594 = vpack.c.bf16 %v589, %v588
    %v595 = vpack.c.bf16 %v591, %v590
    %v602 = vunpack.c.l.b16 %v439
    %v603 = vunpack.c.l.b16 %v440
    %v604 = vunpack.c.l.b16 %v441
    %v605 = vunpack.c.l.b16 %v442
    %v606 = vunpack.c.l.b16 %v443
    %v607 = vunpack.c.l.b16 %v444
    %v608 = vpack.c.b16 %v603, %v602
    %v609 = vpack.c.b16 %v605, %v604
    %v610 = vpack.c.b16 %v607, %v606
    %vm614 = vcmask 392192
    %v616 = vsel %vm614, %v592, 0
    %v619 = vsel %vm614, %v593, 0
    %v622 = vsel %vm614, %v594, 0
    %v625 = vsel %vm614, %v595, 0
    %627 = vmatprep.subr.bf16.mxu0 0
    %628 = vmatpush1.bf16.msra.mxu0 %v608
    %629 = vmatprep.subr.bf16.mxu0 0
    %630 = vmatpush1.bf16.msra.mxu0 %v609
    %631 = vmatprep.subr.bf16.mxu0 0
    %632 = vmatpush1.bf16.msra.mxu0 %v610
    %633 = vmatprep.subr.bf16.mxu0 0
    %634 = vmatpush1.bf16.msra.mxu0 0
    %635 = vmatprep.subr.bf16.mxu0 0
    %636 = vmatpush1.bf16.msra.mxu0 0
    %637 = vmatprep.subr.bf16.mxu0 0
    %638 = vmatpush1.bf16.msra.mxu0 0
    %639 = vmatprep.subr.bf16.mxu0 0
    %640 = vmatpush1.bf16.msra.mxu0 0
    %641 = vmatprep.subr.bf16.mxu0 0
    %642 = vmatpush1.bf16.msra.mxu0 0
    %643 = vmatprep.subr.bf16.mxu0 0
    %644 = vmatpush1.bf16.msra.mxu0 0
    %645 = vmatprep.subr.bf16.mxu0 0
    %646 = vmatpush1.bf16.msra.mxu0 0
    %647 = vmatprep.subr.bf16.mxu0 0
    %648 = vmatpush1.bf16.msra.mxu0 0
    %649 = vmatprep.subr.bf16.mxu0 0
    %650 = vmatpush1.bf16.msra.mxu0 0
    %651 = vmatprep.subr.bf16.mxu0 0
    %652 = vmatpush1.bf16.msra.mxu0 0
    %653 = vmatprep.subr.bf16.mxu0 0
    %654 = vmatpush1.bf16.msra.mxu0 0
    %655 = vmatprep.subr.bf16.mxu0 0
    %656 = vmatpush1.bf16.msra.mxu0 0
    %657 = vmatprep.subr.bf16.mxu0 0
    %658 = vmatpush1.bf16.msra.mxu0 0
    %659 = vmatprep.mubr.bf16.mxu0 0
    %660 = vmatmul.mubr.bf16.gmra.mrb[0].mxu0 %v616
    %v661 = vpop.f32.mrb[0].mxu0
    %v662 = vadd.f32 0.0, %v661
    %v663 = vpop.f32.mrb[0].mxu0
    %v664 = vpop.f32.mrb[0].mxu0
    %v665 = vadd.f32 0.0, %v664
    %v666 = vpop.f32.mrb[0].mxu0
    %667 = vmatprep.mubr.bf16.mxu0 0
    %668 = vmatmul.mubr.bf16.gmra.mrb[0].mxu0 %v619
    %v669 = vpop.f32.mrb[0].mxu0
    %v670 = vadd.f32 0.0, %v669
    %v671 = vpop.f32.mrb[0].mxu0
    %v672 = vpop.f32.mrb[0].mxu0
    %v673 = vadd.f32 0.0, %v672
    %v674 = vpop.f32.mrb[0].mxu0
    %675 = vmatprep.mubr.bf16.mxu0 0
    %676 = vmatmul.mubr.bf16.gmra.mrb[0].mxu0 %v622
    %v677 = vpop.f32.mrb[0].mxu0
    %v678 = vadd.f32 0.0, %v677
    %v679 = vpop.f32.mrb[0].mxu0
    %v680 = vpop.f32.mrb[0].mxu0
    %v681 = vadd.f32 0.0, %v680
    %v682 = vpop.f32.mrb[0].mxu0
    %683 = vmatprep.mubr.bf16.mxu0 0
    %684 = vmatmul.mubr.bf16.gmra.mrb[0].mxu0 %v625
    %v685 = vpop.f32.mrb[0].mxu0
    %v686 = vadd.f32 0.0, %v685
    %v687 = vpop.f32.mrb[0].mxu0
    %v688 = vpop.f32.mrb[0].mxu0
    %v689 = vadd.f32 0.0, %v688
    %v690 = vpop.f32.mrb[0].mxu0
    %691 = vdwg.mxu0
    %v692 = vlaneseq
    %v693 = vshrl.u32 %v692, 7
    %v694 = vsub.s32 0, %v693
    %v695 = vrot.slane %v445, %v694
    %v696 = vmul.f32 %v662, %v695
    %v697 = vmul.f32 %v665, %v695
    %v698 = vmul.f32 %v670, %v695
    %v699 = vmul.f32 %v673, %v695
    %v700 = vmul.f32 %v678, %v695
    %v701 = vmul.f32 %v681, %v695
    %v702 = vmul.f32 %v686, %v695
    %v703 = vmul.f32 %v689, %v695
    %v704 = vlaneseq
    %v705 = vshrl.u32 %v704, 7
    %v706 = vsub.s32 1, %v705
    %v707 = vrot.slane %v445, %v706
    %v708 = vadd.f32 %v696, %v707
    %v709 = vadd.f32 %v697, %v707
    %v710 = vadd.f32 %v698, %v707
    %v711 = vadd.f32 %v699, %v707
    %v712 = vadd.f32 %v700, %v707
    %v713 = vadd.f32 %v701, %v707
    %v714 = vadd.f32 %v702, %v707
    %v715 = vadd.f32 %v703, %v707
    %v716 = vmax.f32 %v708, 0.0
    %v717 = vmax.f32 %v709, 0.0
    %v718 = vmax.f32 %v710, 0.0
    %v719 = vmax.f32 %v711, 0.0
    %v720 = vmax.f32 %v712, 0.0
    %v721 = vmax.f32 %v713, 0.0
    %v722 = vmax.f32 %v714, 0.0
    %v723 = vmax.f32 %v715, 0.0
    %v724 = vld [vmem:[%s5] sm:$0xf]
    %v725 = vld [vmem:[%s5 + $0x4] sm:$0xf]
    %v726 = vld [vmem:[%s5 + $0x8] sm:$0xf]
    %v727 = vld [vmem:[%s5 + $0xc] sm:$0xf]
    %v728 = vld [vmem:[%s5 + $0x10] sm:$0xf]
    %v729 = vld [vmem:[%s5 + $0x14] sm:$0xf]
    %v730 = vld [vmem:[%s6] sm:$0x3]
    %v739 = vrot.slane %v716, 7
    %v740 = vrot.slane %v717, 7
    %v741 = vsel %vm149, %v739, %v740
    %v742 = vrot.slane %v718, 7
    %v743 = vsel %vm149, %v740, %v742
    %v744 = vrot.slane %v719, 7
    %v745 = vsel %vm149, %v742, %v744
    %v746 = vrot.slane %v720, 7
    %v747 = vsel %vm149, %v744, %v746
    %v748 = vrot.slane %v721, 7
    %v749 = vsel %vm149, %v746, %v748
    %v750 = vrot.slane %v722, 7
    %v751 = vsel %vm149, %v748, %v750
    %v752 = vrot.slane %v723, 7
    %v753 = vsel %vm149, %v750, %v752
    %v762 = vsel %vm149, 0.0, %v739
    %v763 = vsel %vm182, 0.0, %v762
    %v764 = vsel %vm183, 0.0, %v741
    %v765 = vsel %vm184, 0.0, %v743
    %v766 = vsel %vm185, 0.0, %v745
    %v767 = vsel %vm186, 0.0, %v747
    %v768 = vsel %vm187, 0.0, %v749
    %v769 = vsel %vm188, 0.0, %v751
    %v770 = vsel %vm189, 0.0, %v753
    %v771 = vrot.slane %v716, 1
    %v772 = vrot.slane %v717, 1
    %v773 = vsel %vm198, %v771, %v772
    %v774 = vrot.slane %v718, 1
    %v775 = vsel %vm198, %v772, %v774
    %v776 = vrot.slane %v719, 1
    %v777 = vsel %vm198, %v774, %v776
    %v778 = vrot.slane %v720, 1
    %v779 = vsel %vm198, %v776, %v778
    %v780 = vrot.slane %v721, 1
    %v781 = vsel %vm198, %v778, %v780
    %v782 = vrot.slane %v722, 1
    %v783 = vsel %vm198, %v780, %v782
    %v784 = vrot.slane %v723, 1
    %v785 = vsel %vm198, %v782, %v784
    %v794 = vsel %vm198, %v784, 0.0
    %v795 = vsel %vm231, 0.0, %v773
    %v796 = vsel %vm232, 0.0, %v775
    %v797 = vsel %vm233, 0.0, %v777
    %v798 = vsel %vm234, 0.0, %v779
    %v799 = vsel %vm235, 0.0, %v781
    %v800 = vsel %vm236, 0.0, %v783
    %v801 = vsel %vm237, 0.0, %v785
    %v802 = vsel %vm238, 0.0, %v794
    %803 = vrot.lane.b32.xlu0 %v716, 16
    %v804 = vpop.permute.xlu0 %803
    %805 = vrot.lane.b32.xlu0 %v717, 16
    %v806 = vpop.permute.xlu0 %805
    %807 = vrot.lane.b32.xlu0 %v718, 16
    %v808 = vpop.permute.xlu0 %807
    %809 = vrot.lane.b32.xlu0 %v719, 16
    %v810 = vpop.permute.xlu0 %809
    %811 = vrot.lane.b32.xlu0 %v720, 16
    %v812 = vpop.permute.xlu0 %811
    %813 = vrot.lane.b32.xlu0 %v721, 16
    %v814 = vpop.permute.xlu0 %813
    %815 = vrot.lane.b32.xlu0 %v722, 16
    %v816 = vpop.permute.xlu0 %815
    %817 = vrot.lane.b32.xlu0 %v723, 16
    %v818 = vpop.permute.xlu0 %817
    %835 = vrot.lane.b32.xlu0 %v795, 32
    %v836 = vpop.permute.xlu0 %835
    %837 = vrot.lane.b32.xlu0 %v796, 32
    %v838 = vpop.permute.xlu0 %837
    %839 = vrot.lane.b32.xlu0 %v797, 32
    %v840 = vpop.permute.xlu0 %839
    %841 = vrot.lane.b32.xlu0 %v798, 32
    %v842 = vpop.permute.xlu0 %841
    %843 = vrot.lane.b32.xlu0 %v799, 32
    %v844 = vpop.permute.xlu0 %843
    %845 = vrot.lane.b32.xlu0 %v800, 32
    %v846 = vpop.permute.xlu0 %845
    %847 = vrot.lane.b32.xlu0 %v801, 32
    %v848 = vpop.permute.xlu0 %847
    %849 = vrot.lane.b32.xlu0 %v802, 32
    %v850 = vpop.permute.xlu0 %849
    %v859 = vsel %vm574, %v763, %v804
    %v860 = vsel %vm574, %v764, %v806
    %v861 = vsel %vm574, %v765, %v808
    %v862 = vsel %vm574, %v766, %v810
    %v863 = vsel %vm574, %v767, %v812
    %v864 = vsel %vm574, %v768, %v814
    %v865 = vsel %vm574, %v769, %v816
    %v866 = vsel %vm574, %v770, %v818
    %v867 = vsel %vm583, %v859, %v836
    %v868 = vsel %vm583, %v860, %v838
    %v869 = vsel %vm583, %v861, %v840
    %v870 = vsel %vm583, %v862, %v842
    %v871 = vsel %vm583, %v863, %v844
    %v872 = vsel %vm583, %v864, %v846
    %v873 = vsel %vm583, %v865, %v848
    %v874 = vsel %vm583, %v866, %v850
    %v875 = vpack.c.bf16 %v868, %v867
    %v876 = vpack.c.bf16 %v870, %v869
    %v877 = vpack.c.bf16 %v872, %v871
    %v878 = vpack.c.bf16 %v874, %v873
    %v885 = vunpack.c.l.b16 %v724
    %v886 = vunpack.c.l.b16 %v725
    %v887 = vunpack.c.l.b16 %v726
    %v888 = vunpack.c.l.b16 %v727
    %v889 = vunpack.c.l.b16 %v728
    %v890 = vunpack.c.l.b16 %v729
    %v891 = vpack.c.b16 %v886, %v885
    %v892 = vpack.c.b16 %v888, %v887
    %v893 = vpack.c.b16 %v890, %v889
    %v898 = vsel %vm614, %v875, 0
    %v901 = vsel %vm614, %v876, 0
    %v904 = vsel %vm614, %v877, 0
    %v907 = vsel %vm614, %v878, 0
    %909 = vmatprep.subr.bf16.mxu0 0
    %910 = vmatpush1.bf16.msra.mxu0 %v891
    %911 = vmatprep.subr.bf16.mxu0 0
    %912 = vmatpush1.bf16.msra.mxu0 %v892
    %913 = vmatprep.subr.bf16.mxu0 0
    %914 = vmatpush1.bf16.msra.mxu0 %v893
    %915 = vmatprep.subr.bf16.mxu0 0
    %916 = vmatpush1.bf16.msra.mxu0 0
    %917 = vmatprep.subr.bf16.mxu0 0
    %918 = vmatpush1.bf16.msra.mxu0 0
    %919 = vmatprep.subr.bf16.mxu0 0
    %920 = vmatpush1.bf16.msra.mxu0 0
    %921 = vmatprep.subr.bf16.mxu0 0
    %922 = vmatpush1.bf16.msra.mxu0 0
    %923 = vmatprep.subr.bf16.mxu0 0
    %924 = vmatpush1.bf16.msra.mxu0 0
    %925 = vmatprep.subr.bf16.mxu0 0
    %926 = vmatpush1.bf16.msra.mxu0 0
    %927 = vmatprep.subr.bf16.mxu0 0
    %928 = vmatpush1.bf16.msra.mxu0 0
    %929 = vmatprep.subr.bf16.mxu0 0
    %930 = vmatpush1.bf16.msra.mxu0 0
    %931 = vmatprep.subr.bf16.mxu0 0
    %932 = vmatpush1.bf16.msra.mxu0 0
    %933 = vmatprep.subr.bf16.mxu0 0
    %934 = vmatpush1.bf16.msra.mxu0 0
    %935 = vmatprep.subr.bf16.mxu0 0
    %936 = vmatpush1.bf16.msra.mxu0 0
    %937 = vmatprep.subr.bf16.mxu0 0
    %938 = vmatpush1.bf16.msra.mxu0 0
    %939 = vmatprep.subr.bf16.mxu0 0
    %940 = vmatpush1.bf16.msra.mxu0 0
    %941 = vmatprep.mubr.bf16.mxu0 0
    %942 = vmatmul.mubr.bf16.gmra.mrb[0].mxu0 %v898
    %v943 = vpop.f32.mrb[0].mxu0
    %v944 = vadd.f32 0.0, %v943
    %v945 = vpop.f32.mrb[0].mxu0
    %v946 = vpop.f32.mrb[0].mxu0
    %v947 = vadd.f32 0.0, %v946
    %v948 = vpop.f32.mrb[0].mxu0
    %949 = vmatprep.mubr.bf16.mxu0 0
    %950 = vmatmul.mubr.bf16.gmra.mrb[0].mxu0 %v901
    %v951 = vpop.f32.mrb[0].mxu0
    %v952 = vadd.f32 0.0, %v951
    %v953 = vpop.f32.mrb[0].mxu0
    %v954 = vpop.f32.mrb[0].mxu0
    %v955 = vadd.f32 0.0, %v954
    %v956 = vpop.f32.mrb[0].mxu0
    %957 = vmatprep.mubr.bf16.mxu0 0
    %958 = vmatmul.mubr.bf16.gmra.mrb[0].mxu0 %v904
    %v959 = vpop.f32.mrb[0].mxu0
    %v960 = vadd.f32 0.0, %v959
    %v961 = vpop.f32.mrb[0].mxu0
    %v962 = vpop.f32.mrb[0].mxu0
    %v963 = vadd.f32 0.0, %v962
    %v964 = vpop.f32.mrb[0].mxu0
    %965 = vmatprep.mubr.bf16.mxu0 0
    %966 = vmatmul.mubr.bf16.gmra.mrb[0].mxu0 %v907
    %v967 = vpop.f32.mrb[0].mxu0
    %v968 = vadd.f32 0.0, %v967
    %v969 = vpop.f32.mrb[0].mxu0
    %v970 = vpop.f32.mrb[0].mxu0
    %v971 = vadd.f32 0.0, %v970
    %v972 = vpop.f32.mrb[0].mxu0
    %973 = vdwg.mxu0
    %v974 = vlaneseq
    %v975 = vshrl.u32 %v974, 7
    %v976 = vsub.s32 0, %v975
    %v977 = vrot.slane %v730, %v976
    %v978 = vmul.f32 %v944, %v977
    %v979 = vmul.f32 %v947, %v977
    %v980 = vmul.f32 %v952, %v977
    %v981 = vmul.f32 %v955, %v977
    %v982 = vmul.f32 %v960, %v977
    %v983 = vmul.f32 %v963, %v977
    %v984 = vmul.f32 %v968, %v977
    %v985 = vmul.f32 %v971, %v977
    %v986 = vlaneseq
    %v987 = vshrl.u32 %v986, 7
    %v988 = vsub.s32 1, %v987
    %v989 = vrot.slane %v730, %v988
    %v990 = vadd.f32 %v978, %v989
    %v991 = vadd.f32 %v979, %v989
    %v992 = vadd.f32 %v980, %v989
    %v993 = vadd.f32 %v981, %v989
    %v994 = vadd.f32 %v982, %v989
    %v995 = vadd.f32 %v983, %v989
    %v996 = vadd.f32 %v984, %v989
    %v997 = vadd.f32 %v985, %v989
    %v998 = vadd.f32 %v990, %v431
    %v999 = vadd.f32 %v991, %v432
    %v1000 = vadd.f32 %v992, %v433
    %v1001 = vadd.f32 %v993, %v434
    %v1002 = vadd.f32 %v994, %v435
    %v1003 = vadd.f32 %v995, %v436
    %v1004 = vadd.f32 %v996, %v437
    %v1005 = vadd.f32 %v997, %v438
    %v1006 = vmax.f32 %v998, 0.0
    %v1007 = vmax.f32 %v999, 0.0
    %v1008 = vmax.f32 %v1000, 0.0
    %v1009 = vmax.f32 %v1001, 0.0
    %v1010 = vmax.f32 %v1002, 0.0
    %v1011 = vmax.f32 %v1003, 0.0
    %v1012 = vmax.f32 %v1004, 0.0
    %v1013 = vmax.f32 %v1005, 0.0
    %v1014 = vlaneseq
    %v1015 = vand.u32 %v1014, 127
    %v1016 = vmul.u32 %v85, 2
    %v1017 = vmul.u32 %v86, 2
    %v1018 = vmul.u32 %v87, 2
    %v1019 = vmul.u32 %v88, 2
    %vm1020 = vcmp.eq.s32.totalorder %v1015, %v1016
    %vm1021 = vcmp.eq.s32.totalorder %v1015, %v1017
    %vm1022 = vcmp.eq.s32.totalorder %v1015, %v1018
    %vm1023 = vcmp.eq.s32.totalorder %v1015, %v1019
    %v1024 = vsel %vm1020, 1, 0
    %v1025 = vsel %vm1021, 1, 0
    %v1026 = vsel %vm1022, 1, 0
    %v1027 = vsel %vm1023, 1, 0
    %v1028 = vcvt.s32.f32 %v1024
    %v1029 = vcvt.s32.f32 %v1025
    %v1030 = vcvt.s32.f32 %v1026
    %v1031 = vcvt.s32.f32 %v1027
    %v1032 = vld [vmem:[%s7] sm:$0xf]
    %v1033 = vld [vmem:[%s7 + $0x4] sm:$0xf]
    %v1034 = vld [vmem:[%s7 + $0x8] sm:$0xf]
    %v1035 = vld [vmem:[%s7 + $0xc] sm:$0xf]
    %v1036 = vld [vmem:[%s7 + $0x10] sm:$0xf]
    %v1037 = vld [vmem:[%s7 + $0x14] sm:$0xf]
    %v1038 = vld [vmem:[%s8] sm:$0x3]
    %v1047 = vrot.slane %v1006, 7
    %v1048 = vrot.slane %v1007, 7
    %v1049 = vsel %vm149, %v1047, %v1048
    %v1050 = vrot.slane %v1008, 7
    %v1051 = vsel %vm149, %v1048, %v1050
    %v1052 = vrot.slane %v1009, 7
    %v1053 = vsel %vm149, %v1050, %v1052
    %v1054 = vrot.slane %v1010, 7
    %v1055 = vsel %vm149, %v1052, %v1054
    %v1056 = vrot.slane %v1011, 7
    %v1057 = vsel %vm149, %v1054, %v1056
    %v1058 = vrot.slane %v1012, 7
    %v1059 = vsel %vm149, %v1056, %v1058
    %v1060 = vrot.slane %v1013, 7
    %v1061 = vsel %vm149, %v1058, %v1060
    %v1070 = vsel %vm149, 0.0, %v1047
    %v1071 = vsel %vm182, 0.0, %v1070
    %v1072 = vsel %vm183, 0.0, %v1049
    %v1073 = vsel %vm184, 0.0, %v1051
    %v1074 = vsel %vm185, 0.0, %v1053
    %v1075 = vsel %vm186, 0.0, %v1055
    %v1076 = vsel %vm187, 0.0, %v1057
    %v1077 = vsel %vm188, 0.0, %v1059
    %v1078 = vsel %vm189, 0.0, %v1061
    %v1079 = vrot.slane %v1006, 1
    %v1080 = vrot.slane %v1007, 1
    %v1081 = vsel %vm198, %v1079, %v1080
    %v1082 = vrot.slane %v1008, 1
    %v1083 = vsel %vm198, %v1080, %v1082
    %v1084 = vrot.slane %v1009, 1
    %v1085 = vsel %vm198, %v1082, %v1084
    %v1086 = vrot.slane %v1010, 1
    %v1087 = vsel %vm198, %v1084, %v1086
    %v1088 = vrot.slane %v1011, 1
    %v1089 = vsel %vm198, %v1086, %v1088
    %v1090 = vrot.slane %v1012, 1
    %v1091 = vsel %vm198, %v1088, %v1090
    %v1092 = vrot.slane %v1013, 1
    %v1093 = vsel %vm198, %v1090, %v1092
    %v1102 = vsel %vm198, %v1092, 0.0
    %v1103 = vsel %vm231, 0.0, %v1081
    %v1104 = vsel %vm232, 0.0, %v1083
    %v1105 = vsel %vm233, 0.0, %v1085
    %v1106 = vsel %vm234, 0.0, %v1087
    %v1107 = vsel %vm235, 0.0, %v1089
    %v1108 = vsel %vm236, 0.0, %v1091
    %v1109 = vsel %vm237, 0.0, %v1093
    %v1110 = vsel %vm238, 0.0, %v1102
    %1111 = vrot.lane.b32.xlu0 %v1006, 16
    %v1112 = vpop.permute.xlu0 %1111
    %1113 = vrot.lane.b32.xlu0 %v1007, 16
    %v1114 = vpop.permute.xlu0 %1113
    %1115 = vrot.lane.b32.xlu0 %v1008, 16
    %v1116 = vpop.permute.xlu0 %1115
    %1117 = vrot.lane.b32.xlu0 %v1009, 16
    %v1118 = vpop.permute.xlu0 %1117
    %1119 = vrot.lane.b32.xlu0 %v1010, 16
    %v1120 = vpop.permute.xlu0 %1119
    %1121 = vrot.lane.b32.xlu0 %v1011, 16
    %v1122 = vpop.permute.xlu0 %1121
    %1123 = vrot.lane.b32.xlu0 %v1012, 16
    %v1124 = vpop.permute.xlu0 %1123
    %1125 = vrot.lane.b32.xlu0 %v1013, 16
    %v1126 = vpop.permute.xlu0 %1125
    %1143 = vrot.lane.b32.xlu0 %v1103, 32
    %v1144 = vpop.permute.xlu0 %1143
    %1145 = vrot.lane.b32.xlu0 %v1104, 32
    %v1146 = vpop.permute.xlu0 %1145
    %1147 = vrot.lane.b32.xlu0 %v1105, 32
    %v1148 = vpop.permute.xlu0 %1147
    %1149 = vrot.lane.b32.xlu0 %v1106, 32
    %v1150 = vpop.permute.xlu0 %1149
    %1151 = vrot.lane.b32.xlu0 %v1107, 32
    %v1152 = vpop.permute.xlu0 %1151
    %1153 = vrot.lane.b32.xlu0 %v1108, 32
    %v1154 = vpop.permute.xlu0 %1153
    %1155 = vrot.lane.b32.xlu0 %v1109, 32
    %v1156 = vpop.permute.xlu0 %1155
    %1157 = vrot.lane.b32.xlu0 %v1110, 32
    %v1158 = vpop.permute.xlu0 %1157
    %v1167 = vsel %vm574, %v1071, %v1112
    %v1168 = vsel %vm574, %v1072, %v1114
    %v1169 = vsel %vm574, %v1073, %v1116
    %v1170 = vsel %vm574, %v1074, %v1118
    %v1171 = vsel %vm574, %v1075, %v1120
    %v1172 = vsel %vm574, %v1076, %v1122
    %v1173 = vsel %vm574, %v1077, %v1124
    %v1174 = vsel %vm574, %v1078, %v1126
    %v1175 = vsel %vm583, %v1167, %v1144
    %v1176 = vsel %vm583, %v1168, %v1146
    %v1177 = vsel %vm583, %v1169, %v1148
    %v1178 = vsel %vm583, %v1170, %v1150
    %v1179 = vsel %vm583, %v1171, %v1152
    %v1180 = vsel %vm583, %v1172, %v1154
    %v1181 = vsel %vm583, %v1173, %v1156
    %v1182 = vsel %vm583, %v1174, %v1158
    %vm1183 = vcmask 523264
    %v1185 = vsel %vm1183, %v1028, 0
    %v1188 = vsel %vm1183, %v1029, 0
    %v1191 = vsel %vm1183, %v1030, 0
    %v1194 = vsel %vm1183, %v1031, 0
    %1196 = vmatprep.subr.mxu0 0.0
    %1197 = vmatpush1.msra.mxu0 %v1175
    %1198 = vmatprep.subr.mxu0 0.0
    %1199 = vmatpush1.msra.mxu0 %v1176
    %1200 = vmatprep.subr.mxu0 0.0
    %1201 = vmatpush1.msra.mxu0 %v1177
    %1202 = vmatprep.subr.mxu0 0.0
    %1203 = vmatpush1.msra.mxu0 %v1178
    %1204 = vmatprep.subr.mxu0 0.0
    %1205 = vmatpush1.msra.mxu0 %v1179
    %1206 = vmatprep.subr.mxu0 0.0
    %1207 = vmatpush1.msra.mxu0 %v1180
    %1208 = vmatprep.subr.mxu0 0.0
    %1209 = vmatpush1.msra.mxu0 %v1181
    %1210 = vmatprep.subr.mxu0 0.0
    %1211 = vmatpush1.msra.mxu0 %v1182
    %1212 = vmatprep.subr.mxu0 0.0
    %1213 = vmatpush1.msra.mxu0 0.0
    %1214 = vmatprep.subr.mxu0 0.0
    %1215 = vmatpush1.msra.mxu0 0.0
    %1216 = vmatprep.subr.mxu0 0.0
    %1217 = vmatpush1.msra.mxu0 0.0
    %1218 = vmatprep.subr.mxu0 0.0
    %1219 = vmatpush1.msra.mxu0 0.0
    %1220 = vmatprep.subr.mxu0 0.0
    %1221 = vmatpush1.msra.mxu0 0.0
    %1222 = vmatprep.subr.mxu0 0.0
    %1223 = vmatpush1.msra.mxu0 0.0
    %1224 = vmatprep.subr.mxu0 0.0
    %1225 = vmatpush1.msra.mxu0 0.0
    %1226 = vmatprep.subr.mxu0 0.0
    %1227 = vmatpush1.msra.mxu0 0.0
    %1228 = vmatprep.subr.mxu0 0.0
    %1229 = vmatpush1.msra.mxu0 0.0
    %1230 = vmatprep.subr.mxu0 0.0
    %1231 = vmatpush1.msra.mxu0 0.0
    %1232 = vmatprep.subr.mxu0 0.0
    %1233 = vmatpush1.msra.mxu0 0.0
    %1234 = vmatprep.subr.mxu0 0.0
    %1235 = vmatpush1.msra.mxu0 0.0
    %1236 = vmatprep.subr.mxu0 0.0
    %1237 = vmatpush1.msra.mxu0 0.0
    %1238 = vmatprep.subr.mxu0 0.0
    %1239 = vmatpush1.msra.mxu0 0.0
    %1240 = vmatprep.subr.mxu0 0.0
    %1241 = vmatpush1.msra.mxu0 0.0
    %1242 = vmatprep.subr.mxu0 0.0
    %1243 = vmatpush1.msra.mxu0 0.0
    %1244 = vmatprep.subr.mxu0 0.0
    %1245 = vmatpush1.msra.mxu0 0.0
    %1246 = vmatprep.subr.mxu0 0.0
    %1247 = vmatpush1.msra.mxu0 0.0
    %1248 = vmatprep.subr.mxu0 0.0
    %1249 = vmatpush1.msra.mxu0 0.0
    %1250 = vmatprep.subr.mxu0 0.0
    %1251 = vmatpush1.msra.mxu0 0.0
    %1252 = vmatprep.subr.mxu0 0.0
    %1253 = vmatpush1.msra.mxu0 0.0
    %1254 = vmatprep.subr.mxu0 0.0
    %1255 = vmatpush1.msra.mxu0 0.0
    %1256 = vmatprep.subr.mxu0 0.0
    %1257 = vmatpush1.msra.mxu0 0.0
    %1258 = vmatprep.subr.mxu0 0.0
    %1259 = vmatpush1.msra.mxu0 0.0
    %1260 = vmatprep.mubr.f32.mxu0 0.0
    %1261 = vmatmul.mubr.f32.gmra.mrb[0].mxu0 %v1185
    %v1262 = vpop.f32.mrb[0].mxu0
    %v1263 = vadd.f32 0.0, %v1262
    %v1264 = vpop.f32.mrb[0].mxu0
    %1265 = vmatprep.mubr.f32.mxu0 0.0
    %1266 = vmatmul.mubr.f32.gmra.mrb[0].mxu0 %v1188
    %v1267 = vpop.f32.mrb[0].mxu0
    %v1268 = vadd.f32 0.0, %v1267
    %v1269 = vpop.f32.mrb[0].mxu0
    %1270 = vmatprep.mubr.f32.mxu0 0.0
    %1271 = vmatmul.mubr.f32.gmra.mrb[0].mxu0 %v1191
    %v1272 = vpop.f32.mrb[0].mxu0
    %v1273 = vadd.f32 0.0, %v1272
    %v1274 = vpop.f32.mrb[0].mxu0
    %1275 = vmatprep.mubr.f32.mxu0 0.0
    %1276 = vmatmul.mubr.f32.gmra.mrb[0].mxu0 %v1194
    %v1277 = vpop.f32.mrb[0].mxu0
    %v1278 = vadd.f32 0.0, %v1277
    %v1279 = vpop.f32.mrb[0].mxu0
    %1280 = vdwg.mxu0
    %v1281 = vpack.c.bf16 %v1268, %v1263
    %v1282 = vpack.c.bf16 %v1278, %v1273
    %v1289 = vunpack.c.l.b16 %v1032
    %v1290 = vunpack.c.l.b16 %v1033
    %v1291 = vunpack.c.l.b16 %v1034
    %v1292 = vunpack.c.l.b16 %v1035
    %v1293 = vunpack.c.l.b16 %v1036
    %v1294 = vunpack.c.l.b16 %v1037
    %v1295 = vpack.c.b16 %v1290, %v1289
    %v1296 = vpack.c.b16 %v1292, %v1291
    %v1297 = vpack.c.b16 %v1294, %v1293
    %v1302 = vsel %vm614, %v1281, 0
    %v1305 = vsel %vm614, %v1282, 0
    %1307 = vmatprep.subr.bf16.mxu0 0
    %1308 = vmatpush1.bf16.msra.mxu0 %v1295
    %1309 = vmatprep.subr.bf16.mxu0 0
    %1310 = vmatpush1.bf16.msra.mxu0 %v1296
    %1311 = vmatprep.subr.bf16.mxu0 0
    %1312 = vmatpush1.bf16.msra.mxu0 %v1297
    %1313 = vmatprep.subr.bf16.mxu0 0
    %1314 = vmatpush1.bf16.msra.mxu0 0
    %1315 = vmatprep.subr.bf16.mxu0 0
    %1316 = vmatpush1.bf16.msra.mxu0 0
    %1317 = vmatprep.subr.bf16.mxu0 0
    %1318 = vmatpush1.bf16.msra.mxu0 0
    %1319 = vmatprep.subr.bf16.mxu0 0
    %1320 = vmatpush1.bf16.msra.mxu0 0
    %1321 = vmatprep.subr.bf16.mxu0 0
    %1322 = vmatpush1.bf16.msra.mxu0 0
    %1323 = vmatprep.subr.bf16.mxu0 0
    %1324 = vmatpush1.bf16.msra.mxu0 0
    %1325 = vmatprep.subr.bf16.mxu0 0
    %1326 = vmatpush1.bf16.msra.mxu0 0
    %1327 = vmatprep.subr.bf16.mxu0 0
    %1328 = vmatpush1.bf16.msra.mxu0 0
    %1329 = vmatprep.subr.bf16.mxu0 0
    %1330 = vmatpush1.bf16.msra.mxu0 0
    %1331 = vmatprep.subr.bf16.mxu0 0
    %1332 = vmatpush1.bf16.msra.mxu0 0
    %1333 = vmatprep.subr.bf16.mxu0 0
    %1334 = vmatpush1.bf16.msra.mxu0 0
    %1335 = vmatprep.subr.bf16.mxu0 0
    %1336 = vmatpush1.bf16.msra.mxu0 0
    %1337 = vmatprep.subr.bf16.mxu0 0
    %1338 = vmatpush1.bf16.msra.mxu0 0
    %1339 = vmatprep.mubr.bf16.mxu0 0
    %1340 = vmatmul.mubr.bf16.gmra.mrb[0].mxu0 %v1302
    %v1341 = vpop.f32.mrb[0].mxu0
    %v1342 = vadd.f32 0.0, %v1341
    %v1343 = vpop.f32.mrb[0].mxu0
    %v1344 = vpop.f32.mrb[0].mxu0
    %v1345 = vadd.f32 0.0, %v1344
    %v1346 = vpop.f32.mrb[0].mxu0
    %1347 = vmatprep.mubr.bf16.mxu0 0
    %1348 = vmatmul.mubr.bf16.gmra.mrb[0].mxu0 %v1305
    %v1349 = vpop.f32.mrb[0].mxu0
    %v1350 = vadd.f32 0.0, %v1349
    %v1351 = vpop.f32.mrb[0].mxu0
    %v1352 = vpop.f32.mrb[0].mxu0
    %v1353 = vadd.f32 0.0, %v1352
    %v1354 = vpop.f32.mrb[0].mxu0
    %1355 = vdwg.mxu0
    %v1356 = vlaneseq
    %v1357 = vshrl.u32 %v1356, 7
    %v1358 = vsub.s32 0, %v1357
    %v1359 = vrot.slane %v1038, %v1358
    %v1360 = vmul.f32 %v1342, %v1359
    %v1361 = vmul.f32 %v1345, %v1359
    %v1362 = vmul.f32 %v1350, %v1359
    %v1363 = vmul.f32 %v1353, %v1359
    %v1364 = vlaneseq
    %v1365 = vshrl.u32 %v1364, 7
    %v1366 = vsub.s32 1, %v1365
    %v1367 = vrot.slane %v1038, %v1366
    %v1368 = vadd.f32 %v1360, %v1367
    %v1369 = vadd.f32 %v1361, %v1367
    %v1370 = vadd.f32 %v1362, %v1367
    %v1371 = vadd.f32 %v1363, %v1367
    %v1372 = vmax.f32 %v1368, 0.0
    %v1373 = vmax.f32 %v1369, 0.0
    %v1374 = vmax.f32 %v1370, 0.0
    %v1375 = vmax.f32 %v1371, 0.0
    %1376 = vmatprep.subr.mxu0 0.0
    %1377 = vmatpush1.msra.mxu0 %v1006
    %1378 = vmatprep.subr.mxu0 0.0
    %1379 = vmatpush1.msra.mxu0 %v1007
    %1380 = vmatprep.subr.mxu0 0.0
    %1381 = vmatpush1.msra.mxu0 %v1008
    %1382 = vmatprep.subr.mxu0 0.0
    %1383 = vmatpush1.msra.mxu0 %v1009
    %1384 = vmatprep.subr.mxu0 0.0
    %1385 = vmatpush1.msra.mxu0 %v1010
    %1386 = vmatprep.subr.mxu0 0.0
    %1387 = vmatpush1.msra.mxu0 %v1011
    %1388 = vmatprep.subr.mxu0 0.0
    %1389 = vmatpush1.msra.mxu0 %v1012
    %1390 = vmatprep.subr.mxu0 0.0
    %1391 = vmatpush1.msra.mxu0 %v1013
    %1392 = vmatprep.subr.mxu0 0.0
    %1393 = vmatpush1.msra.mxu0 0.0
    %1394 = vmatprep.subr.mxu0 0.0
    %1395 = vmatpush1.msra.mxu0 0.0
    %1396 = vmatprep.subr.mxu0 0.0
    %1397 = vmatpush1.msra.mxu0 0.0
    %1398 = vmatprep.subr.mxu0 0.0
    %1399 = vmatpush1.msra.mxu0 0.0
    %1400 = vmatprep.subr.mxu0 0.0
    %1401 = vmatpush1.msra.mxu0 0.0
    %1402 = vmatprep.subr.mxu0 0.0
    %1403 = vmatpush1.msra.mxu0 0.0
    %1404 = vmatprep.subr.mxu0 0.0
    %1405 = vmatpush1.msra.mxu0 0.0
    %1406 = vmatprep.subr.mxu0 0.0
    %1407 = vmatpush1.msra.mxu0 0.0
    %1408 = vmatprep.subr.mxu0 0.0
    %1409 = vmatpush1.msra.mxu0 0.0
    %1410 = vmatprep.subr.mxu0 0.0
    %1411 = vmatpush1.msra.mxu0 0.0
    %1412 = vmatprep.subr.mxu0 0.0
    %1413 = vmatpush1.msra.mxu0 0.0
    %1414 = vmatprep.subr.mxu0 0.0
    %1415 = vmatpush1.msra.mxu0 0.0
    %1416 = vmatprep.subr.mxu0 0.0
    %1417 = vmatpush1.msra.mxu0 0.0
    %1418 = vmatprep.subr.mxu0 0.0
    %1419 = vmatpush1.msra.mxu0 0.0
    %1420 = vmatprep.subr.mxu0 0.0
    %1421 = vmatpush1.msra.mxu0 0.0
    %1422 = vmatprep.subr.mxu0 0.0
    %1423 = vmatpush1.msra.mxu0 0.0
    %1424 = vmatprep.subr.mxu0 0.0
    %1425 = vmatpush1.msra.mxu0 0.0
    %1426 = vmatprep.subr.mxu0 0.0
    %1427 = vmatpush1.msra.mxu0 0.0
    %1428 = vmatprep.subr.mxu0 0.0
    %1429 = vmatpush1.msra.mxu0 0.0
    %1430 = vmatprep.subr.mxu0 0.0
    %1431 = vmatpush1.msra.mxu0 0.0
    %1432 = vmatprep.subr.mxu0 0.0
    %1433 = vmatpush1.msra.mxu0 0.0
    %1434 = vmatprep.subr.mxu0 0.0
    %1435 = vmatpush1.msra.mxu0 0.0
    %1436 = vmatprep.subr.mxu0 0.0
    %1437 = vmatpush1.msra.mxu0 0.0
    %1438 = vmatprep.subr.mxu0 0.0
    %1439 = vmatpush1.msra.mxu0 0.0
    %1440 = vmatprep.mubr.f32.mxu0 0.0
    %1441 = vmatmul.mubr.f32.gmra.mrb[0].mxu0 %v1185
    %v1442 = vpop.f32.mrb[0].mxu0
    %v1443 = vadd.f32 0.0, %v1442
    %v1444 = vpop.f32.mrb[0].mxu0
    %1445 = vmatprep.mubr.f32.mxu0 0.0
    %1446 = vmatmul.mubr.f32.gmra.mrb[0].mxu0 %v1188
    %v1447 = vpop.f32.mrb[0].mxu0
    %v1448 = vadd.f32 0.0, %v1447
    %v1449 = vpop.f32.mrb[0].mxu0
    %1450 = vmatprep.mubr.f32.mxu0 0.0
    %1451 = vmatmul.mubr.f32.gmra.mrb[0].mxu0 %v1191
    %v1452 = vpop.f32.mrb[0].mxu0
    %v1453 = vadd.f32 0.0, %v1452
    %v1454 = vpop.f32.mrb[0].mxu0
    %1455 = vmatprep.mubr.f32.mxu0 0.0
    %1456 = vmatmul.mubr.f32.gmra.mrb[0].mxu0 %v1194
    %v1457 = vpop.f32.mrb[0].mxu0
    %v1458 = vadd.f32 0.0, %v1457
    %v1459 = vpop.f32.mrb[0].mxu0
    %1460 = vdwg.mxu0
    %v1461 = vpack.c.bf16 %v1448, %v1443
    %v1462 = vpack.c.bf16 %v1458, %v1453
    %v1463 = vld [vmem:[%s11] sm:$0xf]
    %v1464 = vld [vmem:[%s11 + $0x4] sm:$0xf]
    %v1467 = vunpack.c.l.b16 %v1463
    %v1468 = vunpack.c.l.b16 %v1464
    %v1469 = vpack.c.b16 %v1468, %v1467
    %v1472 = vsel %vm574, %v1461, 0
    %v1475 = vsel %vm574, %v1462, 0
    %1477 = vmatprep.subr.bf16.mxu0 0
    %1478 = vmatpush1.bf16.msra.mxu0 %v1469
    %1479 = vmatprep.subr.bf16.mxu0 0
    %1480 = vmatpush1.bf16.msra.mxu0 0
    %1481 = vmatprep.subr.bf16.mxu0 0
    %1482 = vmatpush1.bf16.msra.mxu0 0
    %1483 = vmatprep.subr.bf16.mxu0 0
    %1484 = vmatpush1.bf16.msra.mxu0 0
    %1485 = vmatprep.subr.bf16.mxu0 0
    %1486 = vmatpush1.bf16.msra.mxu0 0
    %1487 = vmatprep.subr.bf16.mxu0 0
    %1488 = vmatpush1.bf16.msra.mxu0 0
    %1489 = vmatprep.subr.bf16.mxu0 0
    %1490 = vmatpush1.bf16.msra.mxu0 0
    %1491 = vmatprep.subr.bf16.mxu0 0
    %1492 = vmatpush1.bf16.msra.mxu0 0
    %1493 = vmatprep.subr.bf16.mxu0 0
    %1494 = vmatpush1.bf16.msra.mxu0 0
    %1495 = vmatprep.subr.bf16.mxu0 0
    %1496 = vmatpush1.bf16.msra.mxu0 0
    %1497 = vmatprep.subr.bf16.mxu0 0
    %1498 = vmatpush1.bf16.msra.mxu0 0
    %1499 = vmatprep.subr.bf16.mxu0 0
    %1500 = vmatpush1.bf16.msra.mxu0 0
    %1501 = vmatprep.subr.bf16.mxu0 0
    %1502 = vmatpush1.bf16.msra.mxu0 0
    %1503 = vmatprep.subr.bf16.mxu0 0
    %1504 = vmatpush1.bf16.msra.mxu0 0
    %1505 = vmatprep.subr.bf16.mxu0 0
    %1506 = vmatpush1.bf16.msra.mxu0 0
    %1507 = vmatprep.subr.bf16.mxu0 0
    %1508 = vmatpush1.bf16.msra.mxu0 0
    %1509 = vmatprep.mubr.bf16.mxu0 0
    %1510 = vmatmul.mubr.bf16.gmra.mrb[0].mxu0 %v1472
    %v1511 = vpop.f32.mrb[0].mxu0
    %v1512 = vadd.f32 0.0, %v1511
    %v1513 = vpop.f32.mrb[0].mxu0
    %v1514 = vpop.f32.mrb[0].mxu0
    %v1515 = vadd.f32 0.0, %v1514
    %v1516 = vpop.f32.mrb[0].mxu0
    %1517 = vmatprep.mubr.bf16.mxu0 0
    %1518 = vmatmul.mubr.bf16.gmra.mrb[0].mxu0 %v1475
    %v1519 = vpop.f32.mrb[0].mxu0
    %v1520 = vadd.f32 0.0, %v1519
    %v1521 = vpop.f32.mrb[0].mxu0
    %v1522 = vpop.f32.mrb[0].mxu0
    %v1523 = vadd.f32 0.0, %v1522
    %v1524 = vpop.f32.mrb[0].mxu0
    %1525 = vdwg.mxu0
    %v1526 = vld [vmem:[%s12] sm:$0x3]
    %v1527 = vlaneseq
    %v1528 = vshrl.u32 %v1527, 7
    %v1529 = vsub.s32 0, %v1528
    %v1530 = vrot.slane %v1526, %v1529
    %v1531 = vmul.f32 %v1512, %v1530
    %v1532 = vmul.f32 %v1515, %v1530
    %v1533 = vmul.f32 %v1520, %v1530
    %v1534 = vmul.f32 %v1523, %v1530
    %v1535 = vlaneseq
    %v1536 = vshrl.u32 %v1535, 7
    %v1537 = vsub.s32 1, %v1536
    %v1538 = vrot.slane %v1526, %v1537
    %v1539 = vadd.f32 %v1531, %v1538
    %v1540 = vadd.f32 %v1532, %v1538
    %v1541 = vadd.f32 %v1533, %v1538
    %v1542 = vadd.f32 %v1534, %v1538
    %v1543 = vld [vmem:[%s9] sm:$0xf]
    %v1544 = vld [vmem:[%s9 + $0x4] sm:$0xf]
    %v1545 = vld [vmem:[%s9 + $0x8] sm:$0xf]
    %v1546 = vld [vmem:[%s9 + $0xc] sm:$0xf]
    %v1547 = vld [vmem:[%s9 + $0x10] sm:$0xf]
    %v1548 = vld [vmem:[%s9 + $0x14] sm:$0xf]
    %v1549 = vld [vmem:[%s9 + $0x18] sm:$0xf]
    %v1550 = vld [vmem:[%s9 + $0x1c] sm:$0xf]
    %v1551 = vld [vmem:[%s9 + $0x20] sm:$0xf]
    %v1552 = vld [vmem:[%s9 + $0x24] sm:$0xf]
    %v1553 = vld [vmem:[%s9 + $0x28] sm:$0xf]
    %v1554 = vld [vmem:[%s9 + $0x2c] sm:$0xf]
    %v1555 = vld [vmem:[%s10] sm:$0x3]
    %vm1556 = vcmp.eq.s32.totalorder %v85, 16
    %vm1557 = vcmp.eq.s32.totalorder %v86, 16
    %vm1558 = vcmp.eq.s32.totalorder %v87, 16
    %vm1559 = vcmp.eq.s32.totalorder %v88, 16
    %vm1560 = vmor %vm93, %vm1556
    %vm1561 = vmor %vm94, %vm1557
    %vm1562 = vmor %vm95, %vm1558
    %vm1563 = vmor %vm96, %vm1559
    %vm1564 = vcmp.eq.s32.totalorder %v85, 15
    %vm1565 = vcmp.eq.s32.totalorder %v86, 15
    %vm1566 = vcmp.eq.s32.totalorder %v87, 15
    %vm1567 = vcmp.eq.s32.totalorder %v88, 15
    %vm1568 = vmor %vm1564, %vm117
    %vm1569 = vmor %vm1565, %vm118
    %vm1570 = vmor %vm1566, %vm119
    %vm1571 = vmor %vm1567, %vm120
    %v1576 = vrot.slane %v1372, 7
    %v1577 = vrot.slane %v1373, 7
    %v1578 = vsel %vm149, %v1576, %v1577
    %v1579 = vrot.slane %v1374, 7
    %v1580 = vsel %vm149, %v1577, %v1579
    %v1581 = vrot.slane %v1375, 7
    %v1582 = vsel %vm149, %v1579, %v1581
    %v1587 = vsel %vm149, 0.0, %v1576
    %v1588 = vsel %vm1560, 1, 0
    %v1589 = vsel %vm1561, 1, 0
    %v1590 = vsel %vm1562, 1, 0
    %v1591 = vsel %vm1563, 1, 0
    %vm1592 = vcmp.eq.s32.totalorder %v1588, 1
    %vm1593 = vcmp.eq.s32.totalorder %v1589, 1
    %vm1594 = vcmp.eq.s32.totalorder %v1590, 1
    %vm1595 = vcmp.eq.s32.totalorder %v1591, 1
    %v1596 = vsel %vm1592, 0.0, %v1587
    %v1597 = vsel %vm1593, 0.0, %v1578
    %v1598 = vsel %vm1594, 0.0, %v1580
    %v1599 = vsel %vm1595, 0.0, %v1582
    %v1600 = vrot.slane %v1372, 1
    %v1601 = vrot.slane %v1373, 1
    %v1602 = vsel %vm198, %v1600, %v1601
    %v1603 = vrot.slane %v1374, 1
    %v1604 = vsel %vm198, %v1601, %v1603
    %v1605 = vrot.slane %v1375, 1
    %v1606 = vsel %vm198, %v1603, %v1605
    %v1611 = vsel %vm198, %v1605, 0.0
    %v1612 = vsel %vm1568, 1, 0
    %v1613 = vsel %vm1569, 1, 0
    %v1614 = vsel %vm1570, 1, 0
    %v1615 = vsel %vm1571, 1, 0
    %vm1616 = vcmp.eq.s32.totalorder %v1612, 1
    %vm1617 = vcmp.eq.s32.totalorder %v1613, 1
    %vm1618 = vcmp.eq.s32.totalorder %v1614, 1
    %vm1619 = vcmp.eq.s32.totalorder %v1615, 1
    %v1620 = vsel %vm1616, 0.0, %v1602
    %v1621 = vsel %vm1617, 0.0, %v1604
    %v1622 = vsel %vm1618, 0.0, %v1606
    %v1623 = vsel %vm1619, 0.0, %v1611
    %1624 = vrot.lane.b32.xlu0 %v1372, 32
    %v1625 = vpop.permute.xlu0 %1624
    %1626 = vrot.lane.b32.xlu0 %v1373, 32
    %v1627 = vpop.permute.xlu0 %1626
    %1628 = vrot.lane.b32.xlu0 %v1374, 32
    %v1629 = vpop.permute.xlu0 %1628
    %1630 = vrot.lane.b32.xlu0 %v1375, 32
    %v1631 = vpop.permute.xlu0 %1630
    %1640 = vrot.lane.b32.xlu0 %v1620, 64
    %v1641 = vpop.permute.xlu0 %1640
    %1642 = vrot.lane.b32.xlu0 %v1621, 64
    %v1643 = vpop.permute.xlu0 %1642
    %1644 = vrot.lane.b32.xlu0 %v1622, 64
    %v1645 = vpop.permute.xlu0 %1644
    %1646 = vrot.lane.b32.xlu0 %v1623, 64
    %v1647 = vpop.permute.xlu0 %1646
    %v1652 = vsel %vm583, %v1596, %v1625
    %v1653 = vsel %vm583, %v1597, %v1627
    %v1654 = vsel %vm583, %v1598, %v1629
    %v1655 = vsel %vm583, %v1599, %v1631
    %v1656 = vsel %vm1183, %v1652, %v1641
    %v1657 = vsel %vm1183, %v1653, %v1643
    %v1658 = vsel %vm1183, %v1654, %v1645
    %v1659 = vsel %vm1183, %v1655, %v1647
    %v1660 = vpack.c.bf16 %v1657, %v1656
    %v1661 = vpack.c.bf16 %v1659, %v1658
    %v1674 = vunpack.c.l.b16 %v1543
    %v1675 = vunpack.c.l.b16 %v1544
    %v1676 = vunpack.c.l.b16 %v1545
    %v1677 = vunpack.c.l.b16 %v1546
    %v1678 = vunpack.c.l.b16 %v1547
    %v1679 = vunpack.c.l.b16 %v1548
    %v1680 = vunpack.c.l.b16 %v1549
    %v1681 = vunpack.c.l.b16 %v1550
    %v1682 = vunpack.c.l.b16 %v1551
    %v1683 = vunpack.c.l.b16 %v1552
    %v1684 = vunpack.c.l.b16 %v1553
    %v1685 = vunpack.c.l.b16 %v1554
    %v1686 = vpack.c.b16 %v1675, %v1674
    %v1687 = vpack.c.b16 %v1677, %v1676
    %v1688 = vpack.c.b16 %v1679, %v1678
    %v1689 = vpack.c.b16 %v1681, %v1680
    %v1690 = vpack.c.b16 %v1683, %v1682
    %v1691 = vpack.c.b16 %v1685, %v1684
    %vm1698 = vcmask 785408
    %v1700 = vsel %vm1698, %v1660, 0
    %v1703 = vsel %vm1698, %v1661, 0
    %1705 = vmatprep.subr.bf16.mxu0 0
    %1706 = vmatpush1.bf16.msra.mxu0 %v1686
    %1707 = vmatprep.subr.bf16.mxu0 0
    %1708 = vmatpush1.bf16.msra.mxu0 %v1687
    %1709 = vmatprep.subr.bf16.mxu0 0
    %1710 = vmatpush1.bf16.msra.mxu0 %v1688
    %1711 = vmatprep.subr.bf16.mxu0 0
    %1712 = vmatpush1.bf16.msra.mxu0 %v1689
    %1713 = vmatprep.subr.bf16.mxu0 0
    %1714 = vmatpush1.bf16.msra.mxu0 %v1690
    %1715 = vmatprep.subr.bf16.mxu0 0
    %1716 = vmatpush1.bf16.msra.mxu0 %v1691
    %1717 = vmatprep.subr.bf16.mxu0 0
    %1718 = vmatpush1.bf16.msra.mxu0 0
    %1719 = vmatprep.subr.bf16.mxu0 0
    %1720 = vmatpush1.bf16.msra.mxu0 0
    %1721 = vmatprep.subr.bf16.mxu0 0
    %1722 = vmatpush1.bf16.msra.mxu0 0
    %1723 = vmatprep.subr.bf16.mxu0 0
    %1724 = vmatpush1.bf16.msra.mxu0 0
    %1725 = vmatprep.subr.bf16.mxu0 0
    %1726 = vmatpush1.bf16.msra.mxu0 0
    %1727 = vmatprep.subr.bf16.mxu0 0
    %1728 = vmatpush1.bf16.msra.mxu0 0
    %1729 = vmatprep.subr.bf16.mxu0 0
    %1730 = vmatpush1.bf16.msra.mxu0 0
    %1731 = vmatprep.subr.bf16.mxu0 0
    %1732 = vmatpush1.bf16.msra.mxu0 0
    %1733 = vmatprep.subr.bf16.mxu0 0
    %1734 = vmatpush1.bf16.msra.mxu0 0
    %1735 = vmatprep.subr.bf16.mxu0 0
    %1736 = vmatpush1.bf16.msra.mxu0 0
    %1737 = vmatprep.mubr.bf16.mxu0 0
    %1738 = vmatmul.mubr.bf16.gmra.mrb[0].mxu0 %v1700
    %v1739 = vpop.f32.mrb[0].mxu0
    %v1740 = vadd.f32 0.0, %v1739
    %v1741 = vpop.f32.mrb[0].mxu0
    %v1742 = vpop.f32.mrb[0].mxu0
    %v1743 = vadd.f32 0.0, %v1742
    %v1744 = vpop.f32.mrb[0].mxu0
    %1745 = vmatprep.mubr.bf16.mxu0 0
    %1746 = vmatmul.mubr.bf16.gmra.mrb[0].mxu0 %v1703
    %v1747 = vpop.f32.mrb[0].mxu0
    %v1748 = vadd.f32 0.0, %v1747
    %v1749 = vpop.f32.mrb[0].mxu0
    %v1750 = vpop.f32.mrb[0].mxu0
    %v1751 = vadd.f32 0.0, %v1750
    %v1752 = vpop.f32.mrb[0].mxu0
    %1753 = vdwg.mxu0
    %v1754 = vlaneseq
    %v1755 = vshrl.u32 %v1754, 7
    %v1756 = vsub.s32 0, %v1755
    %v1757 = vrot.slane %v1555, %v1756
    %v1758 = vmul.f32 %v1740, %v1757
    %v1759 = vmul.f32 %v1743, %v1757
    %v1760 = vmul.f32 %v1748, %v1757
    %v1761 = vmul.f32 %v1751, %v1757
    %v1762 = vlaneseq
    %v1763 = vshrl.u32 %v1762, 7
    %v1764 = vsub.s32 1, %v1763
    %v1765 = vrot.slane %v1555, %v1764
    %v1766 = vadd.f32 %v1758, %v1765
    %v1767 = vadd.f32 %v1759, %v1765
    %v1768 = vadd.f32 %v1760, %v1765
    %v1769 = vadd.f32 %v1761, %v1765
    %v1770 = vadd.f32 %v1766, %v1539
    %v1771 = vadd.f32 %v1767, %v1540
    %v1772 = vadd.f32 %v1768, %v1541
    %v1773 = vadd.f32 %v1769, %v1542
    %v1774 = vmax.f32 %v1770, 0.0
    %v1775 = vmax.f32 %v1771, 0.0
    %v1776 = vmax.f32 %v1772, 0.0
    %v1777 = vmax.f32 %v1773, 0.0
    %v1778 = vld [vmem:[%s13] sm:$0xf]
    %v1779 = vld [vmem:[%s13 + $0x4] sm:$0xf]
    %v1780 = vld [vmem:[%s13 + $0x8] sm:$0xf]
    %v1781 = vld [vmem:[%s13 + $0xc] sm:$0xf]
    %v1782 = vld [vmem:[%s13 + $0x10] sm:$0xf]
    %v1783 = vld [vmem:[%s13 + $0x14] sm:$0xf]
    %v1784 = vld [vmem:[%s13 + $0x18] sm:$0xf]
    %v1785 = vld [vmem:[%s13 + $0x1c] sm:$0xf]
    %v1786 = vld [vmem:[%s13 + $0x20] sm:$0xf]
    %v1787 = vld [vmem:[%s13 + $0x24] sm:$0xf]
    %v1788 = vld [vmem:[%s13 + $0x28] sm:$0xf]
    %v1789 = vld [vmem:[%s13 + $0x2c] sm:$0xf]
    %v1790 = vld [vmem:[%s14] sm:$0x3]
    %v1795 = vrot.slane %v1774, 7
    %v1796 = vrot.slane %v1775, 7
    %v1797 = vsel %vm149, %v1795, %v1796
    %v1798 = vrot.slane %v1776, 7
    %v1799 = vsel %vm149, %v1796, %v1798
    %v1800 = vrot.slane %v1777, 7
    %v1801 = vsel %vm149, %v1798, %v1800
    %v1806 = vsel %vm149, 0.0, %v1795
    %v1807 = vsel %vm1592, 0.0, %v1806
    %v1808 = vsel %vm1593, 0.0, %v1797
    %v1809 = vsel %vm1594, 0.0, %v1799
    %v1810 = vsel %vm1595, 0.0, %v1801
    %v1811 = vrot.slane %v1774, 1
    %v1812 = vrot.slane %v1775, 1
    %v1813 = vsel %vm198, %v1811, %v1812
    %v1814 = vrot.slane %v1776, 1
    %v1815 = vsel %vm198, %v1812, %v1814
    %v1816 = vrot.slane %v1777, 1
    %v1817 = vsel %vm198, %v1814, %v1816
    %v1822 = vsel %vm198, %v1816, 0.0
    %v1823 = vsel %vm1616, 0.0, %v1813
    %v1824 = vsel %vm1617, 0.0, %v1815
    %v1825 = vsel %vm1618, 0.0, %v1817
    %v1826 = vsel %vm1619, 0.0, %v1822
    %1827 = vrot.lane.b32.xlu0 %v1774, 32
    %v1828 = vpop.permute.xlu0 %1827
    %1829 = vrot.lane.b32.xlu0 %v1775, 32
    %v1830 = vpop.permute.xlu0 %1829
    %1831 = vrot.lane.b32.xlu0 %v1776, 32
    %v1832 = vpop.permute.xlu0 %1831
    %1833 = vrot.lane.b32.xlu0 %v1777, 32
    %v1834 = vpop.permute.xlu0 %1833
    %1843 = vrot.lane.b32.xlu0 %v1823, 64
    %v1844 = vpop.permute.xlu0 %1843
    %1845 = vrot.lane.b32.xlu0 %v1824, 64
    %v1846 = vpop.permute.xlu0 %1845
    %1847 = vrot.lane.b32.xlu0 %v1825, 64
    %v1848 = vpop.permute.xlu0 %1847
    %1849 = vrot.lane.b32.xlu0 %v1826, 64
    %v1850 = vpop.permute.xlu0 %1849
    %v1855 = vsel %vm583, %v1807, %v1828
    %v1856 = vsel %vm583, %v1808, %v1830
    %v1857 = vsel %vm583, %v1809, %v1832
    %v1858 = vsel %vm583, %v1810, %v1834
    %v1859 = vsel %vm1183, %v1855, %v1844
    %v1860 = vsel %vm1183, %v1856, %v1846
    %v1861 = vsel %vm1183, %v1857, %v1848
    %v1862 = vsel %vm1183, %v1858, %v1850
    %v1863 = vsel %vm583, %v1028, 0
    %v1865 = vsel %vm583, %v1029, 0
    %1867 = vmatprep.subr.mxu0 0.0
    %1868 = vmatpush1.msra.mxu0 %v1859
    %1869 = vmatprep.subr.mxu0 0.0
    %1870 = vmatpush1.msra.mxu0 %v1860
    %1871 = vmatprep.subr.mxu0 0.0
    %1872 = vmatpush1.msra.mxu0 %v1861
    %1873 = vmatprep.subr.mxu0 0.0
    %1874 = vmatpush1.msra.mxu0 %v1862
    %1875 = vmatprep.subr.mxu0 0.0
    %1876 = vmatpush1.msra.mxu0 0.0
    %1877 = vmatprep.subr.mxu0 0.0
    %1878 = vmatpush1.msra.mxu0 0.0
    %1879 = vmatprep.subr.mxu0 0.0
    %1880 = vmatpush1.msra.mxu0 0.0
    %1881 = vmatprep.subr.mxu0 0.0
    %1882 = vmatpush1.msra.mxu0 0.0
    %1883 = vmatprep.subr.mxu0 0.0
    %1884 = vmatpush1.msra.mxu0 0.0
    %1885 = vmatprep.subr.mxu0 0.0
    %1886 = vmatpush1.msra.mxu0 0.0
    %1887 = vmatprep.subr.mxu0 0.0
    %1888 = vmatpush1.msra.mxu0 0.0
    %1889 = vmatprep.subr.mxu0 0.0
    %1890 = vmatpush1.msra.mxu0 0.0
    %1891 = vmatprep.subr.mxu0 0.0
    %1892 = vmatpush1.msra.mxu0 0.0
    %1893 = vmatprep.subr.mxu0 0.0
    %1894 = vmatpush1.msra.mxu0 0.0
    %1895 = vmatprep.subr.mxu0 0.0
    %1896 = vmatpush1.msra.mxu0 0.0
    %1897 = vmatprep.subr.mxu0 0.0
    %1898 = vmatpush1.msra.mxu0 0.0
    %1899 = vmatprep.subr.mxu0 0.0
    %1900 = vmatpush1.msra.mxu0 0.0
    %1901 = vmatprep.subr.mxu0 0.0
    %1902 = vmatpush1.msra.mxu0 0.0
    %1903 = vmatprep.subr.mxu0 0.0
    %1904 = vmatpush1.msra.mxu0 0.0
    %1905 = vmatprep.subr.mxu0 0.0
    %1906 = vmatpush1.msra.mxu0 0.0
    %1907 = vmatprep.subr.mxu0 0.0
    %1908 = vmatpush1.msra.mxu0 0.0
    %1909 = vmatprep.subr.mxu0 0.0
    %1910 = vmatpush1.msra.mxu0 0.0
    %1911 = vmatprep.subr.mxu0 0.0
    %1912 = vmatpush1.msra.mxu0 0.0
    %1913 = vmatprep.subr.mxu0 0.0
    %1914 = vmatpush1.msra.mxu0 0.0
    %1915 = vmatprep.subr.mxu0 0.0
    %1916 = vmatpush1.msra.mxu0 0.0
    %1917 = vmatprep.subr.mxu0 0.0
    %1918 = vmatpush1.msra.mxu0 0.0
    %1919 = vmatprep.subr.mxu0 0.0
    %1920 = vmatpush1.msra.mxu0 0.0
    %1921 = vmatprep.subr.mxu0 0.0
    %1922 = vmatpush1.msra.mxu0 0.0
    %1923 = vmatprep.subr.mxu0 0.0
    %1924 = vmatpush1.msra.mxu0 0.0
    %1925 = vmatprep.subr.mxu0 0.0
    %1926 = vmatpush1.msra.mxu0 0.0
    %1927 = vmatprep.subr.mxu0 0.0
    %1928 = vmatpush1.msra.mxu0 0.0
    %1929 = vmatprep.subr.mxu0 0.0
    %1930 = vmatpush1.msra.mxu0 0.0
    %1931 = vmatprep.mubr.f32.mxu0 0.0
    %1932 = vmatmul.mubr.f32.gmra.mrb[0].mxu0 %v1863
    %v1933 = vpop.f32.mrb[0].mxu0
    %v1934 = vadd.f32 0.0, %v1933
    %v1935 = vpop.f32.mrb[0].mxu0
    %1936 = vmatprep.mubr.f32.mxu0 0.0
    %1937 = vmatmul.mubr.f32.gmra.mrb[0].mxu0 %v1865
    %v1938 = vpop.f32.mrb[0].mxu0
    %v1939 = vadd.f32 0.0, %v1938
    %v1940 = vpop.f32.mrb[0].mxu0
    %1941 = vdwg.mxu0
    %v1942 = vpack.c.bf16 %v1939, %v1934
    %v1955 = vunpack.c.l.b16 %v1778
    %v1956 = vunpack.c.l.b16 %v1779
    %v1957 = vunpack.c.l.b16 %v1780
    %v1958 = vunpack.c.l.b16 %v1781
    %v1959 = vunpack.c.l.b16 %v1782
    %v1960 = vunpack.c.l.b16 %v1783
    %v1961 = vunpack.c.l.b16 %v1784
    %v1962 = vunpack.c.l.b16 %v1785
    %v1963 = vunpack.c.l.b16 %v1786
    %v1964 = vunpack.c.l.b16 %v1787
    %v1965 = vunpack.c.l.b16 %v1788
    %v1966 = vunpack.c.l.b16 %v1789
    %v1967 = vpack.c.b16 %v1956, %v1955
    %v1968 = vpack.c.b16 %v1958, %v1957
    %v1969 = vpack.c.b16 %v1960, %v1959
    %v1970 = vpack.c.b16 %v1962, %v1961
    %v1971 = vpack.c.b16 %v1964, %v1963
    %v1972 = vpack.c.b16 %v1966, %v1965
    %v1980 = vsel %vm1698, %v1942, 0
    %1982 = vmatprep.subr.bf16.mxu0 0
    %1983 = vmatpush1.bf16.msra.mxu0 %v1967
    %1984 = vmatprep.subr.bf16.mxu0 0
    %1985 = vmatpush1.bf16.msra.mxu0 %v1968
    %1986 = vmatprep.subr.bf16.mxu0 0
    %1987 = vmatpush1.bf16.msra.mxu0 %v1969
    %1988 = vmatprep.subr.bf16.mxu0 0
    %1989 = vmatpush1.bf16.msra.mxu0 %v1970
    %1990 = vmatprep.subr.bf16.mxu0 0
    %1991 = vmatpush1.bf16.msra.mxu0 %v1971
    %1992 = vmatprep.subr.bf16.mxu0 0
    %1993 = vmatpush1.bf16.msra.mxu0 %v1972
    %1994 = vmatprep.subr.bf16.mxu0 0
    %1995 = vmatpush1.bf16.msra.mxu0 0
    %1996 = vmatprep.subr.bf16.mxu0 0
    %1997 = vmatpush1.bf16.msra.mxu0 0
    %1998 = vmatprep.subr.bf16.mxu0 0
    %1999 = vmatpush1.bf16.msra.mxu0 0
    %2000 = vmatprep.subr.bf16.mxu0 0
    %2001 = vmatpush1.bf16.msra.mxu0 0
    %2002 = vmatprep.subr.bf16.mxu0 0
    %2003 = vmatpush1.bf16.msra.mxu0 0
    %2004 = vmatprep.subr.bf16.mxu0 0
    %2005 = vmatpush1.bf16.msra.mxu0 0
    %2006 = vmatprep.subr.bf16.mxu0 0
    %2007 = vmatpush1.bf16.msra.mxu0 0
    %2008 = vmatprep.subr.bf16.mxu0 0
    %2009 = vmatpush1.bf16.msra.mxu0 0
    %2010 = vmatprep.subr.bf16.mxu0 0
    %2011 = vmatpush1.bf16.msra.mxu0 0
    %2012 = vmatprep.subr.bf16.mxu0 0
    %2013 = vmatpush1.bf16.msra.mxu0 0
    %2014 = vmatprep.mubr.bf16.mxu0 0
    %2015 = vmatmul.mubr.bf16.gmra.mrb[0].mxu0 %v1980
    %v2016 = vpop.f32.mrb[0].mxu0
    %v2017 = vadd.f32 0.0, %v2016
    %v2018 = vpop.f32.mrb[0].mxu0
    %v2019 = vpop.f32.mrb[0].mxu0
    %v2020 = vadd.f32 0.0, %v2019
    %v2021 = vpop.f32.mrb[0].mxu0
    %2022 = vdwg.mxu0
    %v2023 = vlaneseq
    %v2024 = vshrl.u32 %v2023, 7
    %v2025 = vsub.s32 0, %v2024
    %v2026 = vrot.slane %v1790, %v2025
    %v2027 = vmul.f32 %v2017, %v2026
    %v2028 = vmul.f32 %v2020, %v2026
    %v2029 = vlaneseq
    %v2030 = vshrl.u32 %v2029, 7
    %v2031 = vsub.s32 1, %v2030
    %v2032 = vrot.slane %v1790, %v2031
    %v2033 = vadd.f32 %v2027, %v2032
    %v2034 = vadd.f32 %v2028, %v2032
    %v2035 = vmax.f32 %v2033, 0.0
    %v2036 = vmax.f32 %v2034, 0.0
    %2037 = vmatprep.subr.mxu0 0.0
    %2038 = vmatpush1.msra.mxu0 %v1774
    %2039 = vmatprep.subr.mxu0 0.0
    %2040 = vmatpush1.msra.mxu0 %v1775
    %2041 = vmatprep.subr.mxu0 0.0
    %2042 = vmatpush1.msra.mxu0 %v1776
    %2043 = vmatprep.subr.mxu0 0.0
    %2044 = vmatpush1.msra.mxu0 %v1777
    %2045 = vmatprep.subr.mxu0 0.0
    %2046 = vmatpush1.msra.mxu0 0.0
    %2047 = vmatprep.subr.mxu0 0.0
    %2048 = vmatpush1.msra.mxu0 0.0
    %2049 = vmatprep.subr.mxu0 0.0
    %2050 = vmatpush1.msra.mxu0 0.0
    %2051 = vmatprep.subr.mxu0 0.0
    %2052 = vmatpush1.msra.mxu0 0.0
    %2053 = vmatprep.subr.mxu0 0.0
    %2054 = vmatpush1.msra.mxu0 0.0
    %2055 = vmatprep.subr.mxu0 0.0
    %2056 = vmatpush1.msra.mxu0 0.0
    %2057 = vmatprep.subr.mxu0 0.0
    %2058 = vmatpush1.msra.mxu0 0.0
    %2059 = vmatprep.subr.mxu0 0.0
    %2060 = vmatpush1.msra.mxu0 0.0
    %2061 = vmatprep.subr.mxu0 0.0
    %2062 = vmatpush1.msra.mxu0 0.0
    %2063 = vmatprep.subr.mxu0 0.0
    %2064 = vmatpush1.msra.mxu0 0.0
    %2065 = vmatprep.subr.mxu0 0.0
    %2066 = vmatpush1.msra.mxu0 0.0
    %2067 = vmatprep.subr.mxu0 0.0
    %2068 = vmatpush1.msra.mxu0 0.0
    %2069 = vmatprep.subr.mxu0 0.0
    %2070 = vmatpush1.msra.mxu0 0.0
    %2071 = vmatprep.subr.mxu0 0.0
    %2072 = vmatpush1.msra.mxu0 0.0
    %2073 = vmatprep.subr.mxu0 0.0
    %2074 = vmatpush1.msra.mxu0 0.0
    %2075 = vmatprep.subr.mxu0 0.0
    %2076 = vmatpush1.msra.mxu0 0.0
    %2077 = vmatprep.subr.mxu0 0.0
    %2078 = vmatpush1.msra.mxu0 0.0
    %2079 = vmatprep.subr.mxu0 0.0
    %2080 = vmatpush1.msra.mxu0 0.0
    %2081 = vmatprep.subr.mxu0 0.0
    %2082 = vmatpush1.msra.mxu0 0.0
    %2083 = vmatprep.subr.mxu0 0.0
    %2084 = vmatpush1.msra.mxu0 0.0
    %2085 = vmatprep.subr.mxu0 0.0
    %2086 = vmatpush1.msra.mxu0 0.0
    %2087 = vmatprep.subr.mxu0 0.0
    %2088 = vmatpush1.msra.mxu0 0.0
    %2089 = vmatprep.subr.mxu0 0.0
    %2090 = vmatpush1.msra.mxu0 0.0
    %2091 = vmatprep.subr.mxu0 0.0
    %2092 = vmatpush1.msra.mxu0 0.0
    %2093 = vmatprep.subr.mxu0 0.0
    %2094 = vmatpush1.msra.mxu0 0.0
    %2095 = vmatprep.subr.mxu0 0.0
    %2096 = vmatpush1.msra.mxu0 0.0
    %2097 = vmatprep.subr.mxu0 0.0
    %2098 = vmatpush1.msra.mxu0 0.0
    %2099 = vmatprep.subr.mxu0 0.0
    %2100 = vmatpush1.msra.mxu0 0.0
    %2101 = vmatprep.mubr.f32.mxu0 0.0
    %2102 = vmatmul.mubr.f32.gmra.mrb[0].mxu0 %v1863
    %v2103 = vpop.f32.mrb[0].mxu0
    %v2104 = vadd.f32 0.0, %v2103
    %v2105 = vpop.f32.mrb[0].mxu0
    %2106 = vmatprep.mubr.f32.mxu0 0.0
    %2107 = vmatmul.mubr.f32.gmra.mrb[0].mxu0 %v1865
    %v2108 = vpop.f32.mrb[0].mxu0
    %v2109 = vadd.f32 0.0, %v2108
    %v2110 = vpop.f32.mrb[0].mxu0
    %2111 = vdwg.mxu0
    %v2112 = vpack.c.bf16 %v2109, %v2104
    %v2113 = vld [vmem:[%s17] sm:$0xf]
    %v2114 = vld [vmem:[%s17 + $0x4] sm:$0xf]
    %v2115 = vld [vmem:[%s17 + $0x8] sm:$0xf]
    %v2116 = vld [vmem:[%s17 + $0xc] sm:$0xf]
    %v2121 = vunpack.c.l.b16 %v2113
    %v2122 = vunpack.c.l.b16 %v2114
    %v2123 = vunpack.c.l.b16 %v2115
    %v2124 = vunpack.c.l.b16 %v2116
    %v2125 = vpack.c.b16 %v2122, %v2121
    %v2126 = vpack.c.b16 %v2124, %v2123
    %v2130 = vsel %vm583, %v2112, 0
    %2132 = vmatprep.subr.bf16.mxu0 0
    %2133 = vmatpush1.bf16.msra.mxu0 %v2125
    %2134 = vmatprep.subr.bf16.mxu0 0
    %2135 = vmatpush1.bf16.msra.mxu0 %v2126
    %2136 = vmatprep.subr.bf16.mxu0 0
    %2137 = vmatpush1.bf16.msra.mxu0 0
    %2138 = vmatprep.subr.bf16.mxu0 0
    %2139 = vmatpush1.bf16.msra.mxu0 0
    %2140 = vmatprep.subr.bf16.mxu0 0
    %2141 = vmatpush1.bf16.msra.mxu0 0
    %2142 = vmatprep.subr.bf16.mxu0 0
    %2143 = vmatpush1.bf16.msra.mxu0 0
    %2144 = vmatprep.subr.bf16.mxu0 0
    %2145 = vmatpush1.bf16.msra.mxu0 0
    %2146 = vmatprep.subr.bf16.mxu0 0
    %2147 = vmatpush1.bf16.msra.mxu0 0
    %2148 = vmatprep.subr.bf16.mxu0 0
    %2149 = vmatpush1.bf16.msra.mxu0 0
    %2150 = vmatprep.subr.bf16.mxu0 0
    %2151 = vmatpush1.bf16.msra.mxu0 0
    %2152 = vmatprep.subr.bf16.mxu0 0
    %2153 = vmatpush1.bf16.msra.mxu0 0
    %2154 = vmatprep.subr.bf16.mxu0 0
    %2155 = vmatpush1.bf16.msra.mxu0 0
    %2156 = vmatprep.subr.bf16.mxu0 0
    %2157 = vmatpush1.bf16.msra.mxu0 0
    %2158 = vmatprep.subr.bf16.mxu0 0
    %2159 = vmatpush1.bf16.msra.mxu0 0
    %2160 = vmatprep.subr.bf16.mxu0 0
    %2161 = vmatpush1.bf16.msra.mxu0 0
    %2162 = vmatprep.subr.bf16.mxu0 0
    %2163 = vmatpush1.bf16.msra.mxu0 0
    %2164 = vmatprep.mubr.bf16.mxu0 0
    %2165 = vmatmul.mubr.bf16.gmra.mrb[0].mxu0 %v2130
    %v2166 = vpop.f32.mrb[0].mxu0
    %v2167 = vadd.f32 0.0, %v2166
    %v2168 = vpop.f32.mrb[0].mxu0
    %v2169 = vpop.f32.mrb[0].mxu0
    %v2170 = vadd.f32 0.0, %v2169
    %v2171 = vpop.f32.mrb[0].mxu0
    %2172 = vdwg.mxu0
    %v2173 = vld [vmem:[%s18] sm:$0x3]
    %v2174 = vlaneseq
    %v2175 = vshrl.u32 %v2174, 7
    %v2176 = vsub.s32 0, %v2175
    %v2177 = vrot.slane %v2173, %v2176
    %v2178 = vmul.f32 %v2167, %v2177
    %v2179 = vmul.f32 %v2170, %v2177
    %v2180 = vlaneseq
    %v2181 = vshrl.u32 %v2180, 7
    %v2182 = vsub.s32 1, %v2181
    %v2183 = vrot.slane %v2173, %v2182
    %v2184 = vadd.f32 %v2178, %v2183
    %v2185 = vadd.f32 %v2179, %v2183
    %v2186 = vld [vmem:[%s15] sm:$0xf]
    %v2187 = vld [vmem:[%s15 + $0x4] sm:$0xf]
    %v2188 = vld [vmem:[%s15 + $0x8] sm:$0xf]
    %v2189 = vld [vmem:[%s15 + $0xc] sm:$0xf]
    %v2190 = vld [vmem:[%s15 + $0x10] sm:$0xf]
    %v2191 = vld [vmem:[%s15 + $0x14] sm:$0xf]
    %v2192 = vld [vmem:[%s15 + $0x18] sm:$0xf]
    %v2193 = vld [vmem:[%s15 + $0x1c] sm:$0xf]
    %v2194 = vld [vmem:[%s15 + $0x20] sm:$0xf]
    %v2195 = vld [vmem:[%s15 + $0x24] sm:$0xf]
    %v2196 = vld [vmem:[%s15 + $0x28] sm:$0xf]
    %v2197 = vld [vmem:[%s15 + $0x2c] sm:$0xf]
    %v2198 = vld [vmem:[%s15 + $0x30] sm:$0xf]
    %v2199 = vld [vmem:[%s15 + $0x34] sm:$0xf]
    %v2200 = vld [vmem:[%s15 + $0x38] sm:$0xf]
    %v2201 = vld [vmem:[%s15 + $0x3c] sm:$0xf]
    %v2202 = vld [vmem:[%s15 + $0x40] sm:$0xf]
    %v2203 = vld [vmem:[%s15 + $0x44] sm:$0xf]
    %v2204 = vld [vmem:[%s15 + $0x48] sm:$0xf]
    %v2205 = vld [vmem:[%s15 + $0x4c] sm:$0xf]
    %v2206 = vld [vmem:[%s15 + $0x50] sm:$0xf]
    %v2207 = vld [vmem:[%s15 + $0x54] sm:$0xf]
    %v2208 = vld [vmem:[%s15 + $0x58] sm:$0xf]
    %v2209 = vld [vmem:[%s15 + $0x5c] sm:$0xf]
    %v2210 = vld [vmem:[%s16] sm:$0x3]
    %vm2211 = vcmp.eq.s32.totalorder %v85, 8
    %vm2212 = vcmp.eq.s32.totalorder %v86, 8
    %vm2213 = vmor %vm93, %vm2211
    %vm2214 = vmor %vm94, %vm2212
    %vm2215 = vcmp.eq.s32.totalorder %v85, 7
    %vm2216 = vcmp.eq.s32.totalorder %v86, 7
    %vm2217 = vmor %vm2215, %vm1564
    %vm2218 = vmor %vm2216, %vm1565
    %v2221 = vrot.slane %v2035, 7
    %v2222 = vrot.slane %v2036, 7
    %v2223 = vsel %vm149, %v2221, %v2222
    %v2226 = vsel %vm149, 0.0, %v2221
    %v2227 = vsel %vm2213, 1, 0
    %v2228 = vsel %vm2214, 1, 0
    %vm2229 = vcmp.eq.s32.totalorder %v2227, 1
    %vm2230 = vcmp.eq.s32.totalorder %v2228, 1
    %v2231 = vsel %vm2229, 0.0, %v2226
    %v2232 = vsel %vm2230, 0.0, %v2223
    %v2233 = vrot.slane %v2035, 1
    %v2234 = vrot.slane %v2036, 1
    %v2235 = vsel %vm198, %v2233, %v2234
    %v2238 = vsel %vm198, %v2234, 0.0
    %v2239 = vsel %vm2217, 1, 0
    %v2240 = vsel %vm2218, 1, 0
    %vm2241 = vcmp.eq.s32.totalorder %v2239, 1
    %vm2242 = vcmp.eq.s32.totalorder %v2240, 1
    %v2243 = vsel %vm2241, 0.0, %v2235
    %v2244 = vsel %vm2242, 0.0, %v2238
    %2245 = vrot.lane.b32.xlu0 %v2035, 64
    %v2246 = vpop.permute.xlu0 %2245
    %2247 = vrot.lane.b32.xlu0 %v2036, 64
    %v2248 = vpop.permute.xlu0 %2247
    %v2251 = vsel %vm1183, %v2231, %v2246
    %v2252 = vsel %vm1183, %v2232, %v2248
    %v2253 = vpack.c.bf16 %v2252, %v2251
    %v2254 = vpack.c.bf16 %v2244, %v2243
    %v2279 = vunpack.c.l.b16 %v2186
    %v2280 = vunpack.c.l.b16 %v2187
    %v2281 = vunpack.c.l.b16 %v2188
    %v2282 = vunpack.c.l.b16 %v2189
    %v2283 = vunpack.c.l.b16 %v2190
    %v2284 = vunpack.c.l.b16 %v2191
    %v2285 = vunpack.c.l.b16 %v2192
    %v2286 = vunpack.c.l.b16 %v2193
    %v2287 = vunpack.c.l.b16 %v2194
    %v2288 = vunpack.c.l.b16 %v2195
    %v2289 = vunpack.c.l.b16 %v2196
    %v2290 = vunpack.c.l.b16 %v2197
    %v2291 = vunpack.c.l.b16 %v2198
    %v2292 = vunpack.c.l.b16 %v2199
    %v2293 = vunpack.c.l.b16 %v2200
    %v2294 = vunpack.c.l.b16 %v2201
    %v2295 = vunpack.c.l.b16 %v2202
    %v2296 = vunpack.c.l.b16 %v2203
    %v2297 = vunpack.c.l.b16 %v2204
    %v2298 = vunpack.c.l.b16 %v2205
    %v2299 = vunpack.c.l.b16 %v2206
    %v2300 = vunpack.c.l.b16 %v2207
    %v2301 = vunpack.c.l.b16 %v2208
    %v2302 = vunpack.c.l.b16 %v2209
    %v2303 = vpack.c.b16 %v2280, %v2279
    %v2304 = vpack.c.b16 %v2282, %v2281
    %v2305 = vpack.c.b16 %v2284, %v2283
    %v2306 = vpack.c.b16 %v2286, %v2285
    %v2307 = vpack.c.b16 %v2288, %v2287
    %v2308 = vpack.c.b16 %v2290, %v2289
    %v2309 = vpack.c.b16 %v2292, %v2291
    %v2310 = vpack.c.b16 %v2294, %v2293
    %v2311 = vpack.c.b16 %v2296, %v2295
    %v2312 = vpack.c.b16 %v2298, %v2297
    %v2313 = vpack.c.b16 %v2300, %v2299
    %v2314 = vpack.c.b16 %v2302, %v2301
    %v2328 = vsel %vm1183, %v2254, 0
    %2330 = vmatprep.subr.bf16.mxu0 0
    %2331 = vmatpush1.bf16.msra.mxu0 %v2303
    %2332 = vmatprep.subr.bf16.mxu0 0
    %2333 = vmatpush1.bf16.msra.mxu0 %v2304
    %2334 = vmatprep.subr.bf16.mxu0 0
    %2335 = vmatpush1.bf16.msra.mxu0 %v2305
    %2336 = vmatprep.subr.bf16.mxu0 0
    %2337 = vmatpush1.bf16.msra.mxu0 %v2306
    %2338 = vmatprep.subr.bf16.mxu0 0
    %2339 = vmatpush1.bf16.msra.mxu0 %v2307
    %2340 = vmatprep.subr.bf16.mxu0 0
    %2341 = vmatpush1.bf16.msra.mxu0 %v2308
    %2342 = vmatprep.subr.bf16.mxu0 0
    %2343 = vmatpush1.bf16.msra.mxu0 %v2309
    %2344 = vmatprep.subr.bf16.mxu0 0
    %2345 = vmatpush1.bf16.msra.mxu0 %v2310
    %2346 = vmatprep.subr.bf16.mxu0 0
    %2347 = vmatpush1.bf16.msra.mxu0 %v2311
    %2348 = vmatprep.subr.bf16.mxu0 0
    %2349 = vmatpush1.bf16.msra.mxu0 %v2312
    %2350 = vmatprep.subr.bf16.mxu0 0
    %2351 = vmatpush1.bf16.msra.mxu0 %v2313
    %2352 = vmatprep.subr.bf16.mxu0 0
    %2353 = vmatpush1.bf16.msra.mxu0 %v2314
    %2354 = vmatprep.subr.bf16.mxu0 0
    %2355 = vmatpush1.bf16.msra.mxu0 0
    %2356 = vmatprep.subr.bf16.mxu0 0
    %2357 = vmatpush1.bf16.msra.mxu0 0
    %2358 = vmatprep.subr.bf16.mxu0 0
    %2359 = vmatpush1.bf16.msra.mxu0 0
    %2360 = vmatprep.subr.bf16.mxu0 0
    %2361 = vmatpush1.bf16.msra.mxu0 0
    %2362 = vmatprep.mubr.bf16.mxu0 %v2328
    %2363 = vmatmul.mubr.bf16.gmra.mrb[0].mxu0 %v2253
    %v2364 = vpop.f32.mrb[0].mxu0
    %v2365 = vadd.f32 0.0, %v2364
    %v2366 = vpop.f32.mrb[0].mxu0
    %v2367 = vpop.f32.mrb[0].mxu0
    %v2368 = vadd.f32 0.0, %v2367
    %v2369 = vpop.f32.mrb[0].mxu0
    %2370 = vdwg.mxu0
    %v2371 = vlaneseq
    %v2372 = vshrl.u32 %v2371, 7
    %v2373 = vsub.s32 0, %v2372
    %v2374 = vrot.slane %v2210, %v2373
    %v2375 = vmul.f32 %v2365, %v2374
    %v2376 = vmul.f32 %v2368, %v2374
    %v2377 = vlaneseq
    %v2378 = vshrl.u32 %v2377, 7
    %v2379 = vsub.s32 1, %v2378
    %v2380 = vrot.slane %v2210, %v2379
    %v2381 = vadd.f32 %v2375, %v2380
    %v2382 = vadd.f32 %v2376, %v2380
    %v2383 = vadd.f32 %v2381, %v2184
    %v2384 = vadd.f32 %v2382, %v2185
    %v2385 = vmax.f32 %v2383, 0.0
    %v2386 = vmax.f32 %v2384, 0.0
    %v2387 = vpack.c.bf16 %v2386, %v2385
    %v2388 = vld [vmem:[%s19] sm:$0xf]
    %v2389 = vld [vmem:[%s19 + $0x4] sm:$0xf]
    %v2390 = vld [vmem:[%s19 + $0x8] sm:$0xf]
    %v2391 = vld [vmem:[%s19 + $0xc] sm:$0xf]
    %v2392 = vld [vmem:[%s19 + $0x10] sm:$0xf]
    %v2393 = vld [vmem:[%s19 + $0x14] sm:$0xf]
    %v2394 = vld [vmem:[%s19 + $0x18] sm:$0xf]
    %v2395 = vld [vmem:[%s19 + $0x1c] sm:$0xf]
    %v2396 = vld [vmem:[%s20] sm:$0x1]
    %v2398 = vlaneseq
    %v2399 = vshrl.u32 %v2398, 7
    %v2400 = vsub.s32 0, %v2399
    %v2401 = vrot.slane %v2396, %v2400
    %v2411 = vunpack.c.l.b16 %v2388
    %v2412 = vunpack.c.l.b16 %v2389
    %v2413 = vunpack.c.l.b16 %v2390
    %v2414 = vunpack.c.l.b16 %v2391
    %v2415 = vunpack.c.l.b16 %v2392
    %v2416 = vunpack.c.l.b16 %v2393
    %v2417 = vunpack.c.l.b16 %v2394
    %v2418 = vunpack.c.l.b16 %v2395
    %v2419 = vpack.c.b16 %v2412, %v2411
    %v2420 = vpack.c.b16 %v2414, %v2413
    %v2421 = vpack.c.b16 %v2416, %v2415
    %v2422 = vpack.c.b16 %v2418, %v2417
    %v2428 = vsel %vm1183, %v2387, 0
    %2430 = vmatprep.subr.bf16.mxu0 0
    %2431 = vmatpush1.bf16.msra.mxu0 %v2419
    %2432 = vmatprep.subr.bf16.mxu0 0
    %2433 = vmatpush1.bf16.msra.mxu0 %v2420
    %2434 = vmatprep.subr.bf16.mxu0 0
    %2435 = vmatpush1.bf16.msra.mxu0 %v2421
    %2436 = vmatprep.subr.bf16.mxu0 0
    %2437 = vmatpush1.bf16.msra.mxu0 %v2422
    %2438 = vmatprep.subr.bf16.mxu0 0
    %2439 = vmatpush1.bf16.msra.mxu0 0
    %2440 = vmatprep.subr.bf16.mxu0 0
    %2441 = vmatpush1.bf16.msra.mxu0 0
    %2442 = vmatprep.subr.bf16.mxu0 0
    %2443 = vmatpush1.bf16.msra.mxu0 0
    %2444 = vmatprep.subr.bf16.mxu0 0
    %2445 = vmatpush1.bf16.msra.mxu0 0
    %2446 = vmatprep.subr.bf16.mxu0 0
    %2447 = vmatpush1.bf16.msra.mxu0 0
    %2448 = vmatprep.subr.bf16.mxu0 0
    %2449 = vmatpush1.bf16.msra.mxu0 0
    %2450 = vmatprep.subr.bf16.mxu0 0
    %2451 = vmatpush1.bf16.msra.mxu0 0
    %2452 = vmatprep.subr.bf16.mxu0 0
    %2453 = vmatpush1.bf16.msra.mxu0 0
    %2454 = vmatprep.subr.bf16.mxu0 0
    %2455 = vmatpush1.bf16.msra.mxu0 0
    %2456 = vmatprep.subr.bf16.mxu0 0
    %2457 = vmatpush1.bf16.msra.mxu0 0
    %2458 = vmatprep.subr.bf16.mxu0 0
    %2459 = vmatpush1.bf16.msra.mxu0 0
    %2460 = vmatprep.subr.bf16.mxu0 0
    %2461 = vmatpush1.bf16.msra.mxu0 0
    %2462 = vmatprep.mubr.bf16.mxu0 0
    %2463 = vmatmul.mubr.bf16.gmra.mrb[0].mxu0 %v2428
    %v2464 = vpop.f32.mrb[0].mxu0
    %v2465 = vadd.f32 %v2401, %v2464
    %v2466 = vpop.f32.mrb[0].mxu0
    %v2467 = vpop.f32.mrb[0].mxu0
    %v2468 = vadd.f32 %v2401, %v2467
    %v2469 = vpop.f32.mrb[0].mxu0
    %2470 = vdwg.mxu0
    %v2471 = vmul.u32 %v85, 8
    %vm2472 = vcmp.ge.s32.totalorder %v1015, %v2471
    %v2473 = vadd.s32 %v85, 1
    %v2474 = vmul.u32 %v2473, 8
    %vm2475 = vcmp.lt.s32.totalorder %v1015, %v2474
    %vm2476 = vmand %vm2472, %vm2475
    %v2477 = vsel %vm2476, 0.125, 0.0
    %2478 = vst [vmem:[%s21] sm:$0xff] %v2465
    %2479 = vst [vmem:[%s21 + $0x8] sm:$0xff] %v2468
    %v2481 = vsel %vm574, %v2477, 0
    %2483 = vmatprep.subr.mxu0 0.0
    %2484 = vmatpush1.msra.mxu0 %v2385
    %2485 = vmatprep.subr.mxu0 0.0
    %2486 = vmatpush1.msra.mxu0 %v2386
    %2487 = vmatprep.subr.mxu0 0.0
    %2488 = vmatpush1.msra.mxu0 0.0
    %2489 = vmatprep.subr.mxu0 0.0
    %2490 = vmatpush1.msra.mxu0 0.0
    %2491 = vmatprep.subr.mxu0 0.0
    %2492 = vmatpush1.msra.mxu0 0.0
    %2493 = vmatprep.subr.mxu0 0.0
    %2494 = vmatpush1.msra.mxu0 0.0
    %2495 = vmatprep.subr.mxu0 0.0
    %2496 = vmatpush1.msra.mxu0 0.0
    %2497 = vmatprep.subr.mxu0 0.0
    %2498 = vmatpush1.msra.mxu0 0.0
    %2499 = vmatprep.subr.mxu0 0.0
    %2500 = vmatpush1.msra.mxu0 0.0
    %2501 = vmatprep.subr.mxu0 0.0
    %2502 = vmatpush1.msra.mxu0 0.0
    %2503 = vmatprep.subr.mxu0 0.0
    %2504 = vmatpush1.msra.mxu0 0.0
    %2505 = vmatprep.subr.mxu0 0.0
    %2506 = vmatpush1.msra.mxu0 0.0
    %2507 = vmatprep.subr.mxu0 0.0
    %2508 = vmatpush1.msra.mxu0 0.0
    %2509 = vmatprep.subr.mxu0 0.0
    %2510 = vmatpush1.msra.mxu0 0.0
    %2511 = vmatprep.subr.mxu0 0.0
    %2512 = vmatpush1.msra.mxu0 0.0
    %2513 = vmatprep.subr.mxu0 0.0
    %2514 = vmatpush1.msra.mxu0 0.0
    %2515 = vmatprep.subr.mxu0 0.0
    %2516 = vmatpush1.msra.mxu0 0.0
    %2517 = vmatprep.subr.mxu0 0.0
    %2518 = vmatpush1.msra.mxu0 0.0
    %2519 = vmatprep.subr.mxu0 0.0
    %2520 = vmatpush1.msra.mxu0 0.0
    %2521 = vmatprep.subr.mxu0 0.0
    %2522 = vmatpush1.msra.mxu0 0.0
    %2523 = vmatprep.subr.mxu0 0.0
    %2524 = vmatpush1.msra.mxu0 0.0
    %2525 = vmatprep.subr.mxu0 0.0
    %2526 = vmatpush1.msra.mxu0 0.0
    %2527 = vmatprep.subr.mxu0 0.0
    %2528 = vmatpush1.msra.mxu0 0.0
    %2529 = vmatprep.subr.mxu0 0.0
    %2530 = vmatpush1.msra.mxu0 0.0
    %2531 = vmatprep.subr.mxu0 0.0
    %2532 = vmatpush1.msra.mxu0 0.0
    %2533 = vmatprep.subr.mxu0 0.0
    %2534 = vmatpush1.msra.mxu0 0.0
    %2535 = vmatprep.subr.mxu0 0.0
    %2536 = vmatpush1.msra.mxu0 0.0
    %2537 = vmatprep.subr.mxu0 0.0
    %2538 = vmatpush1.msra.mxu0 0.0
    %2539 = vmatprep.subr.mxu0 0.0
    %2540 = vmatpush1.msra.mxu0 0.0
    %2541 = vmatprep.subr.mxu0 0.0
    %2542 = vmatpush1.msra.mxu0 0.0
    %2543 = vmatprep.subr.mxu0 0.0
    %2544 = vmatpush1.msra.mxu0 0.0
    %2545 = vmatprep.subr.mxu0 0.0
    %2546 = vmatpush1.msra.mxu0 0.0
    %2547 = vmatprep.mubr.f32.mxu0 0.0
    %2548 = vmatmul.mubr.f32.gmra.mrb[0].mxu0 %v2481
    %v2549 = vpop.f32.mrb[0].mxu0
    %v2550 = vadd.f32 0.0, %v2549
    %v2551 = vpop.f32.mrb[0].mxu0
    %2552 = vdwg.mxu0
    %vm2553 = vcmask 517120
    %2554 = vst.msk [vmem:[#allocation2] sm:$0x3] %vm2553, %v2550
    %2555 = vmatprep.subr.mxu0 0.0
    %2556 = vmatpush1.msra.mxu0 %v2465
    %2557 = vmatprep.subr.mxu0 0.0
    %2558 = vmatpush1.msra.mxu0 %v2468
    %2559 = vmatprep.subr.mxu0 0.0
    %2560 = vmatpush1.msra.mxu0 0.0
    %2561 = vmatprep.subr.mxu0 0.0
    %2562 = vmatpush1.msra.mxu0 0.0
    %2563 = vmatprep.subr.mxu0 0.0
    %2564 = vmatpush1.msra.mxu0 0.0
    %2565 = vmatprep.subr.mxu0 0.0
    %2566 = vmatpush1.msra.mxu0 0.0
    %2567 = vmatprep.subr.mxu0 0.0
    %2568 = vmatpush1.msra.mxu0 0.0
    %2569 = vmatprep.subr.mxu0 0.0
    %2570 = vmatpush1.msra.mxu0 0.0
    %2571 = vmatprep.subr.mxu0 0.0
    %2572 = vmatpush1.msra.mxu0 0.0
    %2573 = vmatprep.subr.mxu0 0.0
    %2574 = vmatpush1.msra.mxu0 0.0
    %2575 = vmatprep.subr.mxu0 0.0
    %2576 = vmatpush1.msra.mxu0 0.0
    %2577 = vmatprep.subr.mxu0 0.0
    %2578 = vmatpush1.msra.mxu0 0.0
    %2579 = vmatprep.subr.mxu0 0.0
    %2580 = vmatpush1.msra.mxu0 0.0
    %2581 = vmatprep.subr.mxu0 0.0
    %2582 = vmatpush1.msra.mxu0 0.0
    %2583 = vmatprep.subr.mxu0 0.0
    %2584 = vmatpush1.msra.mxu0 0.0
    %2585 = vmatprep.subr.mxu0 0.0
    %2586 = vmatpush1.msra.mxu0 0.0
    %2587 = vmatprep.subr.mxu0 0.0
    %2588 = vmatpush1.msra.mxu0 0.0
    %2589 = vmatprep.subr.mxu0 0.0
    %2590 = vmatpush1.msra.mxu0 0.0
    %2591 = vmatprep.subr.mxu0 0.0
    %2592 = vmatpush1.msra.mxu0 0.0
    %2593 = vmatprep.subr.mxu0 0.0
    %2594 = vmatpush1.msra.mxu0 0.0
    %2595 = vmatprep.subr.mxu0 0.0
    %2596 = vmatpush1.msra.mxu0 0.0
    %2597 = vmatprep.subr.mxu0 0.0
    %2598 = vmatpush1.msra.mxu0 0.0
    %2599 = vmatprep.subr.mxu0 0.0
    %2600 = vmatpush1.msra.mxu0 0.0
    %2601 = vmatprep.subr.mxu0 0.0
    %2602 = vmatpush1.msra.mxu0 0.0
    %2603 = vmatprep.subr.mxu0 0.0
    %2604 = vmatpush1.msra.mxu0 0.0
    %2605 = vmatprep.subr.mxu0 0.0
    %2606 = vmatpush1.msra.mxu0 0.0
    %2607 = vmatprep.subr.mxu0 0.0
    %2608 = vmatpush1.msra.mxu0 0.0
    %2609 = vmatprep.subr.mxu0 0.0
    %2610 = vmatpush1.msra.mxu0 0.0
    %2611 = vmatprep.subr.mxu0 0.0
    %2612 = vmatpush1.msra.mxu0 0.0
    %2613 = vmatprep.subr.mxu0 0.0
    %2614 = vmatpush1.msra.mxu0 0.0
    %2615 = vmatprep.subr.mxu0 0.0
    %2616 = vmatpush1.msra.mxu0 0.0
    %2617 = vmatprep.subr.mxu0 0.0
    %2618 = vmatpush1.msra.mxu0 0.0
    %2619 = vmatprep.mubr.f32.mxu0 0.0
    %2620 = vmatmul.mubr.f32.gmra.mrb[0].mxu0 %v2481
    %v2621 = vpop.f32.mrb[0].mxu0
    %v2622 = vadd.f32 0.0, %v2621
    %v2623 = vpop.f32.mrb[0].mxu0
    %2624 = vdwg.mxu0
    %2625 = vst [vmem:[#allocation4] sm:$0x3] %v2622
    // Predicated region
    $region86: #{resnet_forward.1} parent=1 // pred_check
      _
    $region87: #{resnet_forward.1} parent=1 // pred_check_branch
      %2627 = sbr.rel (0) target = $region89
    $region88: #{resnet_forward.1} parent=1 // pred_region
      _
    $region89: #{resnet_forward.1} parent=1 // pred_fallthru
      _
    // Predicated region
    $region90: #{resnet_forward.1} parent=1 // pred_check
      _
    $region91: #{resnet_forward.1} parent=1 // pred_check_branch
      %2629 = sbr.rel (0) target = $region93
    $region92: #{resnet_forward.1} parent=1 // pred_region
      %s2631 = ssub.s32 32, 32
      %2632 = vsyncadd [#allocation3], %s2631
      %s2634 = sshll.u32 [#allocation2], 4
      %s2635 = int_to_ptr.vmem [resolvable:$true] %s2634
      %2637 = dma.vmem_to_hbm [thread:$0]  %s2635, 32, %s22, [#allocation3]
    $region93: #{resnet_forward.1} parent=1 // pred_fallthru
      _
    // Predicated region
    $region94: #{resnet_forward.1} parent=1 // pred_check
      _
    $region95: #{resnet_forward.1} parent=1 // pred_check_branch
      %2639 = sbr.rel (0) target = $region97
    $region96: #{resnet_forward.1} parent=1 // pred_region
      %s2641 = ssub.s32 32, 32
      %2642 = vsyncadd [#allocation5], %s2641
      %s2644 = sshll.u32 [#allocation4], 4
      %s2645 = int_to_ptr.vmem [resolvable:$true] %s2644
      %2647 = dma.vmem_to_hbm [thread:$0]  %s2645, 32, %s23, [#allocation5]
    $region97: #{resnet_forward.1} parent=1 // pred_fallthru
      _
    // Predicated region
    $region98: #{resnet_forward.1} parent=1 // pred_check
      _
    $region99: #{resnet_forward.1} parent=1 // pred_check_branch
      %2649 = sbr.rel (0) target = $region101
    $region100: #{resnet_forward.1} parent=1 // pred_region
      _
    $region101: #{resnet_forward.1} parent=1 // pred_fallthru
      _
    // Predicated region
    $region102: #{resnet_forward.1} parent=1 // pred_check
      _
    $region103: #{resnet_forward.1} parent=1 // pred_check_branch
      %2651 = sbr.rel (0) target = $region105
    $region104: #{resnet_forward.1} parent=1 // pred_region
      %2652 = dma.done [#allocation3], 32
    $region105: #{resnet_forward.1} parent=1 // pred_fallthru
      _
    // Predicated region
    $region106: #{resnet_forward.1} parent=1 // pred_check
      _
    $region107: #{resnet_forward.1} parent=1 // pred_check_branch
      %2654 = sbr.rel (0) target = $region109
    $region108: #{resnet_forward.1} parent=1 // pred_region
      %2655 = dma.done [#allocation5], 32
    $region109: #{resnet_forward.1} parent=1 // pred_fallthru
      _
    %2656 = vsyncpa [#allocation3], 1
    %2657 = vsyncpa [#allocation5], 1

</llo_original>
